<compile_context>
chip_gen: v6e
topology: v6e:2x2x1
jax: 0.10.0
libtpu: 0.0.40
codegen_flags: <defaults>
</compile_context>

<pallas_src>
import jax
import jax.numpy as jnp
from jax import lax
from jax.experimental import pallas as pl
from jax.experimental.pallas import tpu as pltpu

EPS = 1e-5


# ---------------------------------------------------------------------------
# shared helper: 3x3 conv (H taps) on the width-folded layout
# pad_ref : (H+2, Kin)  H-padded activation rows, channels fused into lanes
# w_ref   : (3, Kin, Kout) one width-folded weight matrix per kh tap
# ---------------------------------------------------------------------------
def _conv3x3_rows(pad_ref, w_ref, H):
    acc = jnp.dot(pad_ref[0:H, :], w_ref[0], preferred_element_type=jnp.float32)
    acc = acc + jnp.dot(pad_ref[1:H + 1, :], w_ref[1],
                        preferred_element_type=jnp.float32)
    acc = acc + jnp.dot(pad_ref[2:H + 2, :], w_ref[2],
                        preferred_element_type=jnp.float32)
    return acc


# ---------------------------------------------------------------------------
# pass 1: conv1 (no bias) + per-tile [sum, sum-of-squares] for bn1 stats
# ---------------------------------------------------------------------------
def conv1_kernel(x_ref, w_ref, c1_ref, st_ref, pad_ref):
    # x_ref : (1, H, W*Cin)     w_ref : (3, W*Cin, W*Cout)
    # c1_ref: (1, H, W*Cout)    st_ref: (1, 2, W*Cout)
    # pad_ref: (H+2, W*Cin) VMEM scratch
    H = x_ref.shape[1]
    Kin = x_ref.shape[2]
    # height zero-padding: zero only the two border rows, copy the interior
    pad_ref[0:1, :] = jnp.zeros((1, Kin), jnp.float32)
    pad_ref[H + 1:H + 2, :] = jnp.zeros((1, Kin), jnp.float32)
    pad_ref[1:H + 1, :] = x_ref[0]

    acc = _conv3x3_rows(pad_ref, w_ref, H)              # (H, W*Cout), f32
    c1_ref[0] = acc
    st_ref[0, 0:1, :] = jnp.sum(acc, axis=0, keepdims=True)
    st_ref[0, 1:2, :] = jnp.sum(acc * acc, axis=0, keepdims=True)


# ---------------------------------------------------------------------------
# pass 2: bn1 + relu + conv2 (no bias) + per-tile stats for bn2
# ---------------------------------------------------------------------------
def bn_relu_conv2_kernel(c1_ref, s1_ref, t1_ref, w_ref, c2_ref, st_ref, pad_ref):
    # c1_ref: (1, H, K)   s1_ref/t1_ref: (1, K) lane-tiled bn1 scale/shift
    # w_ref : (3, K, K)   c2_ref: (1, H, K)   st_ref: (1, 2, K)
    # pad_ref: (H+2, K) VMEM scratch
    H = c1_ref.shape[1]
    K = c1_ref.shape[2]
    a = jnp.maximum(c1_ref[0] * s1_ref[...] + t1_ref[...], 0.0)   # bn1 + relu

    pad_ref[0:1, :] = jnp.zeros((1, K), jnp.float32)
    pad_ref[H + 1:H + 2, :] = jnp.zeros((1, K), jnp.float32)
    pad_ref[1:H + 1, :] = a

    acc = _conv3x3_rows(pad_ref, w_ref, H)
    c2_ref[0] = acc
    st_ref[0, 0:1, :] = jnp.sum(acc, axis=0, keepdims=True)
    st_ref[0, 1:2, :] = jnp.sum(acc * acc, axis=0, keepdims=True)


# ---------------------------------------------------------------------------
# pass 3: bn2 + residual (identity = conv1 + b1, with b1 folded into t2) + relu
# ---------------------------------------------------------------------------
def bn_residual_relu_kernel(c2_ref, c1_ref, s2_ref, t2_ref, y_ref):
    y = c2_ref[0] * s2_ref[...] + t2_ref[...] + c1_ref[0]
    y_ref[0] = jnp.maximum(y, 0.0)


# ---------------------------------------------------------------------------
# wrapper-side helpers (tiny JAX glue)
# ---------------------------------------------------------------------------
def _fold_width(w_oihw, W):
    """PyTorch (Cout, Cin, 3, 3) -> (3, W*Cin, W*Cout): the kw taps and the
    width zero-padding are folded into a block-banded matrix per kh tap."""
    Co, Ci, KH, KW = w_oihw.shape
    wt = jnp.transpose(w_oihw, (2, 3, 1, 0)).astype(jnp.float32)   # (KH,KW,Ci,Co)
    # shift[q, v, w] = 1 iff v == w + q - 1  (valid width positions only)
    shift = jnp.stack([jnp.eye(W, k=1 - q, dtype=jnp.float32) for q in range(KW)])
    big = jnp.einsum('qvw,hqio->hviwo', shift, wt)                 # (KH,W,Ci,W,Co)
    return big.reshape(KH, W * Ci, W * Co)


def _bn_scale_shift(st, gamma, beta, count, W, C):
    """st: (Ntiles, 2, W*C) partial [sum, sumsq] -> lane-tiled (1, W*C) scale/shift."""
    s = st.sum(axis=0).reshape(2, W, C).sum(axis=1)      # (2, C)
    mean = s[0] / count
    var = s[1] / count - mean * mean                     # biased (training mode)
    scale = gamma.astype(jnp.float32) * lax.rsqrt(var + EPS)
    shift = beta.astype(jnp.float32) - mean * scale
    return (jnp.tile(scale, W).reshape(1, W * C),
            jnp.tile(shift, W).reshape(1, W * C))


@jax.jit
def basic_res_block(x_nchw, params):
    """x_nchw: (N, Cin, H, W) float32 -> (N, Cout, H, W) float32."""
    N, Ci, H, W = x_nchw.shape
    Co = params["w1"].shape[0]
    Kin, Kout = W * Ci, W * Co

    # NCHW -> (N, H, W*Cin): channels fused into the lane axis (lane-dense)
    xf = jnp.transpose(x_nchw, (0, 2, 3, 1)).reshape(N, H, Kin).astype(jnp.float32)

    w1 = _fold_width(params["w1"], W)                    # (3, Kin, Kout)
    w2 = _fold_width(params["w2"], W)                    # (3, Kout, Kout)
    # b2 is mathematically cancelled by bn2's mean subtraction -> never used.
    # b1 only matters through the identity branch -> folded into t2 below.
    b1f = jnp.tile(params["b1"].astype(jnp.float32), W).reshape(1, Kout)

    cparams = pltpu.CompilerParams(
        dimension_semantics=("parallel",),               # batch tiles -> both TCs (v7x)
        vmem_limit_bytes=32 * 1024 * 1024)

    tile = lambda shape: pl.BlockSpec(shape, lambda n: (n, 0, 0))
    whole3 = lambda shape: pl.BlockSpec(shape, lambda n: (0, 0, 0))
    whole2 = lambda shape: pl.BlockSpec(shape, lambda n: (0, 0))

    # ---- pass 1: conv1 + bn1 stat partials ---------------------------------
    c1, st1 = pl.pallas_call(
        conv1_kernel,
        grid=(N,),
        in_specs=[tile((1, H, Kin)), whole3((3, Kin, Kout))],
        out_specs=(tile((1, H, Kout)), tile((1, 2, Kout))),
        out_shape=(jax.ShapeDtypeStruct((N, H, Kout), jnp.float32),
                   jax.ShapeDtypeStruct((N, 2, Kout), jnp.float32)),
        scratch_shapes=[pltpu.VMEM((H + 2, Kin), jnp.float32)],
        compiler_params=cparams,
    )(xf, w1)

    count = float(N * H * W)
    s1, t1 = _bn_scale_shift(st1, params["g1"], params["be1"], count, W, Co)

    # ---- pass 2: bn1 + relu + conv2 + bn2 stat partials ---------------------
    c2, st2 = pl.pallas_call(
        bn_relu_conv2_kernel,
        grid=(N,),
        in_specs=[tile((1, H, Kout)), whole2((1, Kout)), whole2((1, Kout)),
                  whole3((3, Kout, Kout))],
        out_specs=(tile((1, H, Kout)), tile((1, 2, Kout))),
        out_shape=(jax.ShapeDtypeStruct((N, H, Kout), jnp.float32),
                   jax.ShapeDtypeStruct((N, 2, Kout), jnp.float32)),
        scratch_shapes=[pltpu.VMEM((H + 2, Kout), jnp.float32)],
        compiler_params=cparams,
    )(c1, s1, t1, w2)

    s2, t2 = _bn_scale_shift(st2, params["g2"], params["be2"], count, W, Co)
    t2 = t2 + b1f          # fold identity-branch bias into the bn2 shift vector

    # ---- pass 3: bn2 + residual (+b1 via t2) + relu --------------------------
    yf = pl.pallas_call(
        bn_residual_relu_kernel,
        grid=(N,),
        in_specs=[tile((1, H, Kout)), tile((1, H, Kout)),
                  whole2((1, Kout)), whole2((1, Kout))],
        out_specs=tile((1, H, Kout)),
        out_shape=jax.ShapeDtypeStruct((N, H, Kout), jnp.float32),
        compiler_params=cparams,
    )(c2, c1, s2, t2)

    # (N, H, W*Cout) -> NCHW
    return jnp.transpose(yf.reshape(N, H, W, Co), (0, 3, 1, 2))


# ---------------- pure-JAX reference (NCHW, matches PyTorch semantics) -------
def ref_forward(x, p):
    def conv(x, w, b):
        y = lax.conv_general_dilated(
            x, w, window_strides=(1, 1), padding="SAME",
            dimension_numbers=("NCHW", "OIHW", "NCHW"))
        return y + b[None, :, None, None]

    def bn(x, g, be):
        m = x.mean(axis=(0, 2, 3), keepdims=True)
        v = ((x - m) ** 2).mean(axis=(0, 2, 3), keepdims=True)
        return (x - m) / jnp.sqrt(v + EPS) * g[None, :, None, None] \
               + be[None, :, None, None]

    c1 = conv(x, p["w1"], p["b1"])
    identity = c1
    out = jax.nn.relu(bn(c1, p["g1"], p["be1"]))
    c2 = conv(out, p["w2"], p["b2"])
    out = bn(c2, p["g2"], p["be2"]) + identity
    return jax.nn.relu(out)


if __name__ == "__main__":
    in_channels, out_channels = 4, 8
    N, H, W = 2, 16, 16

    key = jax.random.PRNGKey(0)
    ks = jax.random.split(key, 9)
    params = {
        "w1": 0.1 * jax.random.normal(ks[0], (out_channels, in_channels, 3, 3), jnp.float32),
        "b1": 0.1 * jax.random.normal(ks[1], (out_channels,), jnp.float32),
        "g1": 1.0 + 0.1 * jax.random.normal(ks[2], (out_channels,), jnp.float32),
        "be1": 0.1 * jax.random.normal(ks[3], (out_channels,), jnp.float32),
        "w2": 0.1 * jax.random.normal(ks[4], (out_channels, out_channels, 3, 3), jnp.float32),
        "b2": 0.1 * jax.random.normal(ks[5], (out_channels,), jnp.float32),
        "g2": 1.0 + 0.1 * jax.random.normal(ks[6], (out_channels,), jnp.float32),
        "be2": 0.1 * jax.random.normal(ks[7], (out_channels,), jnp.float32),
    }
    x = jax.random.normal(ks[8], (N, in_channels, H, W), jnp.float32)

    out = jax.block_until_ready(basic_res_block(x, params))
    ref = jax.block_until_ready(ref_forward(x, params))

    assert out.shape == (N, out_channels, H, W), out.shape
    err = float(jnp.max(jnp.abs(out - ref)))
    assert err < 2e-4, err
    print("KERNEL_OK")
</pallas_src>

<mosaic_0001>
module attributes {stable_mosaic.version = 11 : i64} {
  func.func @conv1_kernel(%arg0: i32, %arg1: memref<1x16x64xf32, #tpu.memory_space<vmem>>, %arg2: memref<3x64x128xf32, #tpu.memory_space<vmem>>, %arg3: memref<1x16x128xf32, #tpu.memory_space<vmem>>, %arg4: memref<1x2x128xf32, #tpu.memory_space<vmem>>, %arg5: memref<18x64xf32, #tpu.memory_space<vmem>>) attributes {dimension_semantics = [#tpu.dimension_semantics<parallel>], iteration_bounds = array<i64: 2>, scalar_prefetch = 0 : i64, scratch_operands = 1 : i64, tpu.core_type = #tpu.core_type<tc>, window_params = [{transform_indices = @transform_0, window_bounds = array<i64: 1, 16, 64>}, {pipeline_mode = #tpu.pipeline_mode<synchronous>, transform_indices = @transform_1, window_bounds = array<i64: 3, 64, 128>}, {transform_indices = @transform_2, window_bounds = array<i64: 1, 16, 128>}, {transform_indices = @transform_3, window_bounds = array<i64: 1, 2, 128>}]} {
    %cst = arith.constant 0.000000e+00 : f32
    %0 = vector.broadcast %cst : f32 to vector<1x64xf32>
    %c0 = arith.constant 0 : index
    %c0_0 = arith.constant 0 : index
    %1 = vector.load %arg5[%c0, %c0_0] : memref<18x64xf32, #tpu.memory_space<vmem>>, vector<1x64xf32>
    tpu.vector_store %arg5[%c0, %c0_0], %0 {strides = array<i32>} : memref<18x64xf32, #tpu.memory_space<vmem>>, vector<1x64xf32>,
    %cst_1 = arith.constant 0.000000e+00 : f32
    %2 = vector.broadcast %cst_1 : f32 to vector<1x64xf32>
    %c17 = arith.constant 17 : index
    %c0_2 = arith.constant 0 : index
    %3 = vector.load %arg5[%c17, %c0_2] : memref<18x64xf32, #tpu.memory_space<vmem>>, vector<1x64xf32>
    tpu.vector_store %arg5[%c17, %c0_2], %2 {strides = array<i32>} : memref<18x64xf32, #tpu.memory_space<vmem>>, vector<1x64xf32>,
    %c0_3 = arith.constant 0 : index
    %c0_4 = arith.constant 0 : index
    %c0_5 = arith.constant 0 : index
    %4 = vector.load %arg1[%c0_3, %c0_4, %c0_5] : memref<1x16x64xf32, #tpu.memory_space<vmem>>, vector<1x16x64xf32>
    %5 = vector.shape_cast %4 : vector<1x16x64xf32> to vector<16x64xf32>
    %c1 = arith.constant 1 : index
    %c0_6 = arith.constant 0 : index
    %6 = vector.load %arg5[%c1, %c0_6] : memref<18x64xf32, #tpu.memory_space<vmem>>, vector<16x64xf32>
    tpu.vector_store %arg5[%c1, %c0_6], %5 {strides = array<i32>} : memref<18x64xf32, #tpu.memory_space<vmem>>, vector<16x64xf32>,
    %c0_7 = arith.constant 0 : index
    %c0_8 = arith.constant 0 : index
    %7 = vector.load %arg5[%c0_7, %c0_8] : memref<18x64xf32, #tpu.memory_space<vmem>>, vector<16x64xf32>
    %c0_9 = arith.constant 0 : index
    %c0_10 = arith.constant 0 : index
    %c0_11 = arith.constant 0 : index
    %8 = vector.load %arg2[%c0_9, %c0_10, %c0_11] : memref<3x64x128xf32, #tpu.memory_space<vmem>>, vector<1x64x128xf32>
    %9 = vector.shape_cast %8 : vector<1x64x128xf32> to vector<64x128xf32>
    %cst_12 = arith.constant dense<0.000000e+00> : vector<16x128xf32>
    %10 = tpu.matmul %7, %9, %cst_12 {dimension_numbers = #tpu.dot_dimension_numbers<[1], [0], [0], [1], [0, 0, 1, 1], [], []>} : vector<16x64xf32>, vector<64x128xf32>, vector<16x128xf32> -> vector<16x128xf32>
    %c1_13 = arith.constant 1 : index
    %c0_14 = arith.constant 0 : index
    %11 = vector.load %arg5[%c1_13, %c0_14] : memref<18x64xf32, #tpu.memory_space<vmem>>, vector<16x64xf32>
    %c1_15 = arith.constant 1 : index
    %c0_16 = arith.constant 0 : index
    %c0_17 = arith.constant 0 : index
    %12 = vector.load %arg2[%c1_15, %c0_16, %c0_17] : memref<3x64x128xf32, #tpu.memory_space<vmem>>, vector<1x64x128xf32>
    %13 = vector.shape_cast %12 : vector<1x64x128xf32> to vector<64x128xf32>
    %cst_18 = arith.constant dense<0.000000e+00> : vector<16x128xf32>
    %14 = tpu.matmul %11, %13, %cst_18 {dimension_numbers = #tpu.dot_dimension_numbers<[1], [0], [0], [1], [0, 0, 1, 1], [], []>} : vector<16x64xf32>, vector<64x128xf32>, vector<16x128xf32> -> vector<16x128xf32>
    %15 = arith.addf %10, %14 : vector<16x128xf32>
    %c2 = arith.constant 2 : index
    %c0_19 = arith.constant 0 : index
    %16 = vector.load %arg5[%c2, %c0_19] : memref<18x64xf32, #tpu.memory_space<vmem>>, vector<16x64xf32>
    %c2_20 = arith.constant 2 : index
    %c0_21 = arith.constant 0 : index
    %c0_22 = arith.constant 0 : index
    %17 = vector.load %arg2[%c2_20, %c0_21, %c0_22] : memref<3x64x128xf32, #tpu.memory_space<vmem>>, vector<1x64x128xf32>
    %18 = vector.shape_cast %17 : vector<1x64x128xf32> to vector<64x128xf32>
    %cst_23 = arith.constant dense<0.000000e+00> : vector<16x128xf32>
    %19 = tpu.matmul %16, %18, %cst_23 {dimension_numbers = #tpu.dot_dimension_numbers<[1], [0], [0], [1], [0, 0, 1, 1], [], []>} : vector<16x64xf32>, vector<64x128xf32>, vector<16x128xf32> -> vector<16x128xf32>
    %20 = arith.addf %15, %19 : vector<16x128xf32>
    %c0_24 = arith.constant 0 : index
    %c0_25 = arith.constant 0 : index
    %c0_26 = arith.constant 0 : index
    %21 = vector.load %arg3[%c0_24, %c0_25, %c0_26] : memref<1x16x128xf32, #tpu.memory_space<vmem>>, vector<1x16x128xf32>
    %22 = vector.shape_cast %21 : vector<1x16x128xf32> to vector<16x128xf32>
    %23 = vector.shape_cast %20 : vector<16x128xf32> to vector<1x16x128xf32>
    tpu.vector_store %arg3[%c0_24, %c0_25, %c0_26], %23 {strides = array<i32>} : memref<1x16x128xf32, #tpu.memory_space<vmem>>, vector<1x16x128xf32>,
    %cst_27 = arith.constant dense<0.000000e+00> : vector<128xf32>
    %24 = vector.multi_reduction <add>, %20, %cst_27 [0] : vector<16x128xf32> to vector<128xf32>
    %25 = vector.shape_cast %24 : vector<128xf32> to vector<1x128xf32>
    %c0_28 = arith.constant 0 : index
    %c0_29 = arith.constant 0 : index
    %c0_30 = arith.constant 0 : index
    %26 = vector.load %arg4[%c0_28, %c0_29, %c0_30] : memref<1x2x128xf32, #tpu.memory_space<vmem>>, vector<1x1x128xf32>
    %27 = vector.shape_cast %26 : vector<1x1x128xf32> to vector<1x128xf32>
    %28 = vector.shape_cast %25 : vector<1x128xf32> to vector<1x1x128xf32>
    tpu.vector_store %arg4[%c0_28, %c0_29, %c0_30], %28 {strides = array<i32>} : memref<1x2x128xf32, #tpu.memory_space<vmem>>, vector<1x1x128xf32>,
    %29 = arith.mulf %20, %20 : vector<16x128xf32>
    %cst_31 = arith.constant dense<0.000000e+00> : vector<128xf32>
    %30 = vector.multi_reduction <add>, %29, %cst_31 [0] : vector<16x128xf32> to vector<128xf32>
    %31 = vector.shape_cast %30 : vector<128xf32> to vector<1x128xf32>
    %c0_32 = arith.constant 0 : index
    %c1_33 = arith.constant 1 : index
    %c0_34 = arith.constant 0 : index
    %32 = vector.load %arg4[%c0_32, %c1_33, %c0_34] : memref<1x2x128xf32, #tpu.memory_space<vmem>>, vector<1x1x128xf32>
    %33 = vector.shape_cast %32 : vector<1x1x128xf32> to vector<1x128xf32>
    %34 = vector.shape_cast %31 : vector<1x128xf32> to vector<1x1x128xf32>
    tpu.vector_store %arg4[%c0_32, %c1_33, %c0_34], %34 {strides = array<i32>} : memref<1x2x128xf32, #tpu.memory_space<vmem>>, vector<1x1x128xf32>,
    return
  }
  func.func @transform_0(%arg0: i32) -> (i32, i32, i32) {
    %c0_i32 = arith.constant 0 : i32
    %c0_i32_0 = arith.constant 0 : i32
    %c0_i32_1 = arith.constant 0 : i32
    return %arg0, %c0_i32, %c0_i32_0 : i32, i32, i32
  }
  func.func @transform_1(%arg0: i32) -> (i32, i32, i32) {
    %c0_i32 = arith.constant 0 : i32
    %c0_i32_0 = arith.constant 0 : i32
    %c0_i32_1 = arith.constant 0 : i32
    %c0_i32_2 = arith.constant 0 : i32
    return %c0_i32, %c0_i32_0, %c0_i32_1 : i32, i32, i32
  }
  func.func @transform_2(%arg0: i32) -> (i32, i32, i32) {
    %c0_i32 = arith.constant 0 : i32
    %c0_i32_0 = arith.constant 0 : i32
    %c0_i32_1 = arith.constant 0 : i32
    return %arg0, %c0_i32, %c0_i32_0 : i32, i32, i32
  }
  func.func @transform_3(%arg0: i32) -> (i32, i32, i32) {
    %c0_i32 = arith.constant 0 : i32
    %c0_i32_0 = arith.constant 0 : i32
    %c0_i32_1 = arith.constant 0 : i32
    return %arg0, %c0_i32, %c0_i32_0 : i32, i32, i32
  }
}

module attributes {stable_mosaic.version = 11 : i64} {
  func.func @bn_relu_conv2_kernel(%arg0: i32, %arg1: memref<1x16x128xf32, #tpu.memory_space<vmem>>, %arg2: memref<1x128xf32, #tpu.memory_space<vmem>>, %arg3: memref<1x128xf32, #tpu.memory_space<vmem>>, %arg4: memref<3x128x128xf32, #tpu.memory_space<vmem>>, %arg5: memref<1x16x128xf32, #tpu.memory_space<vmem>>, %arg6: memref<1x2x128xf32, #tpu.memory_space<vmem>>, %arg7: memref<18x128xf32, #tpu.memory_space<vmem>>) attributes {dimension_semantics = [#tpu.dimension_semantics<parallel>], iteration_bounds = array<i64: 2>, scalar_prefetch = 0 : i64, scratch_operands = 1 : i64, tpu.core_type = #tpu.core_type<tc>, window_params = [{transform_indices = @transform_0, window_bounds = array<i64: 1, 16, 128>}, {pipeline_mode = #tpu.pipeline_mode<synchronous>, transform_indices = @transform_1, window_bounds = array<i64: 1, 128>}, {pipeline_mode = #tpu.pipeline_mode<synchronous>, transform_indices = @transform_2, window_bounds = array<i64: 1, 128>}, {pipeline_mode = #tpu.pipeline_mode<synchronous>, transform_indices = @transform_3, window_bounds = array<i64: 3, 128, 128>}, {transform_indices = @transform_4, window_bounds = array<i64: 1, 16, 128>}, {transform_indices = @transform_5, window_bounds = array<i64: 1, 2, 128>}]} {
    %c0 = arith.constant 0 : index
    %c0_0 = arith.constant 0 : index
    %c0_1 = arith.constant 0 : index
    %0 = vector.load %arg1[%c0, %c0_0, %c0_1] : memref<1x16x128xf32, #tpu.memory_space<vmem>>, vector<1x16x128xf32>
    %1 = vector.shape_cast %0 : vector<1x16x128xf32> to vector<16x128xf32>
    %c0_2 = arith.constant 0 : index
    %c0_3 = arith.constant 0 : index
    %2 = vector.load %arg2[%c0_2, %c0_3] : memref<1x128xf32, #tpu.memory_space<vmem>>, vector<1x128xf32>
    %3 = vector.broadcast %2 : vector<1x128xf32> to vector<16x128xf32>
    %4 = arith.mulf %1, %3 : vector<16x128xf32>
    %c0_4 = arith.constant 0 : index
    %c0_5 = arith.constant 0 : index
    %5 = vector.load %arg3[%c0_4, %c0_5] : memref<1x128xf32, #tpu.memory_space<vmem>>, vector<1x128xf32>
    %6 = vector.broadcast %5 : vector<1x128xf32> to vector<16x128xf32>
    %7 = arith.addf %4, %6 : vector<16x128xf32>
    %cst = arith.constant 0.000000e+00 : f32
    %8 = vector.broadcast %cst : f32 to vector<16x128xf32>
    %9 = arith.maximumf %7, %8 : vector<16x128xf32>
    %cst_6 = arith.constant 0.000000e+00 : f32
    %10 = vector.broadcast %cst_6 : f32 to vector<1x128xf32>
    %c0_7 = arith.constant 0 : index
    %c0_8 = arith.constant 0 : index
    %11 = vector.load %arg7[%c0_7, %c0_8] : memref<18x128xf32, #tpu.memory_space<vmem>>, vector<1x128xf32>
    tpu.vector_store %arg7[%c0_7, %c0_8], %10 {strides = array<i32>} : memref<18x128xf32, #tpu.memory_space<vmem>>, vector<1x128xf32>,
    %cst_9 = arith.constant 0.000000e+00 : f32
    %12 = vector.broadcast %cst_9 : f32 to vector<1x128xf32>
    %c17 = arith.constant 17 : index
    %c0_10 = arith.constant 0 : index
    %13 = vector.load %arg7[%c17, %c0_10] : memref<18x128xf32, #tpu.memory_space<vmem>>, vector<1x128xf32>
    tpu.vector_store %arg7[%c17, %c0_10], %12 {strides = array<i32>} : memref<18x128xf32, #tpu.memory_space<vmem>>, vector<1x128xf32>,
    %c1 = arith.constant 1 : index
    %c0_11 = arith.constant 0 : index
    %14 = vector.load %arg7[%c1, %c0_11] : memref<18x128xf32, #tpu.memory_space<vmem>>, vector<16x128xf32>
    tpu.vector_store %arg7[%c1, %c0_11], %9 {strides = array<i32>} : memref<18x128xf32, #tpu.memory_space<vmem>>, vector<16x128xf32>,
    %c0_12 = arith.constant 0 : index
    %c0_13 = arith.constant 0 : index
    %15 = vector.load %arg7[%c0_12, %c0_13] : memref<18x128xf32, #tpu.memory_space<vmem>>, vector<16x128xf32>
    %c0_14 = arith.constant 0 : index
    %c0_15 = arith.constant 0 : index
    %c0_16 = arith.constant 0 : index
    %16 = vector.load %arg4[%c0_14, %c0_15, %c0_16] : memref<3x128x128xf32, #tpu.memory_space<vmem>>, vector<1x128x128xf32>
    %17 = vector.shape_cast %16 : vector<1x128x128xf32> to vector<128x128xf32>
    %cst_17 = arith.constant dense<0.000000e+00> : vector<16x128xf32>
    %18 = tpu.matmul %15, %17, %cst_17 {dimension_numbers = #tpu.dot_dimension_numbers<[1], [0], [0], [1], [0, 0, 1, 1], [], []>} : vector<16x128xf32>, vector<128x128xf32>, vector<16x128xf32> -> vector<16x128xf32>
    %c1_18 = arith.constant 1 : index
    %c0_19 = arith.constant 0 : index
    %19 = vector.load %arg7[%c1_18, %c0_19] : memref<18x128xf32, #tpu.memory_space<vmem>>, vector<16x128xf32>
    %c1_20 = arith.constant 1 : index
    %c0_21 = arith.constant 0 : index
    %c0_22 = arith.constant 0 : index
    %20 = vector.load %arg4[%c1_20, %c0_21, %c0_22] : memref<3x128x128xf32, #tpu.memory_space<vmem>>, vector<1x128x128xf32>
    %21 = vector.shape_cast %20 : vector<1x128x128xf32> to vector<128x128xf32>
    %cst_23 = arith.constant dense<0.000000e+00> : vector<16x128xf32>
    %22 = tpu.matmul %19, %21, %cst_23 {dimension_numbers = #tpu.dot_dimension_numbers<[1], [0], [0], [1], [0, 0, 1, 1], [], []>} : vector<16x128xf32>, vector<128x128xf32>, vector<16x128xf32> -> vector<16x128xf32>
    %23 = arith.addf %18, %22 : vector<16x128xf32>
    %c2 = arith.constant 2 : index
    %c0_24 = arith.constant 0 : index
    %24 = vector.load %arg7[%c2, %c0_24] : memref<18x128xf32, #tpu.memory_space<vmem>>, vector<16x128xf32>
    %c2_25 = arith.constant 2 : index
    %c0_26 = arith.constant 0 : index
    %c0_27 = arith.constant 0 : index
    %25 = vector.load %arg4[%c2_25, %c0_26, %c0_27] : memref<3x128x128xf32, #tpu.memory_space<vmem>>, vector<1x128x128xf32>
    %26 = vector.shape_cast %25 : vector<1x128x128xf32> to vector<128x128xf32>
    %cst_28 = arith.constant dense<0.000000e+00> : vector<16x128xf32>
    %27 = tpu.matmul %24, %26, %cst_28 {dimension_numbers = #tpu.dot_dimension_numbers<[1], [0], [0], [1], [0, 0, 1, 1], [], []>} : vector<16x128xf32>, vector<128x128xf32>, vector<16x128xf32> -> vector<16x128xf32>
    %28 = arith.addf %23, %27 : vector<16x128xf32>
    %c0_29 = arith.constant 0 : index
    %c0_30 = arith.constant 0 : index
    %c0_31 = arith.constant 0 : index
    %29 = vector.load %arg5[%c0_29, %c0_30, %c0_31] : memref<1x16x128xf32, #tpu.memory_space<vmem>>, vector<1x16x128xf32>
    %30 = vector.shape_cast %29 : vector<1x16x128xf32> to vector<16x128xf32>
    %31 = vector.shape_cast %28 : vector<16x128xf32> to vector<1x16x128xf32>
    tpu.vector_store %arg5[%c0_29, %c0_30, %c0_31], %31 {strides = array<i32>} : memref<1x16x128xf32, #tpu.memory_space<vmem>>, vector<1x16x128xf32>,
    %cst_32 = arith.constant dense<0.000000e+00> : vector<128xf32>
    %32 = vector.multi_reduction <add>, %28, %cst_32 [0] : vector<16x128xf32> to vector<128xf32>
    %33 = vector.shape_cast %32 : vector<128xf32> to vector<1x128xf32>
    %c0_33 = arith.constant 0 : index
    %c0_34 = arith.constant 0 : index
    %c0_35 = arith.constant 0 : index
    %34 = vector.load %arg6[%c0_33, %c0_34, %c0_35] : memref<1x2x128xf32, #tpu.memory_space<vmem>>, vector<1x1x128xf32>
    %35 = vector.shape_cast %34 : vector<1x1x128xf32> to vector<1x128xf32>
    %36 = vector.shape_cast %33 : vector<1x128xf32> to vector<1x1x128xf32>
    tpu.vector_store %arg6[%c0_33, %c0_34, %c0_35], %36 {strides = array<i32>} : memref<1x2x128xf32, #tpu.memory_space<vmem>>, vector<1x1x128xf32>,
    %37 = arith.mulf %28, %28 : vector<16x128xf32>
    %cst_36 = arith.constant dense<0.000000e+00> : vector<128xf32>
    %38 = vector.multi_reduction <add>, %37, %cst_36 [0] : vector<16x128xf32> to vector<128xf32>
    %39 = vector.shape_cast %38 : vector<128xf32> to vector<1x128xf32>
    %c0_37 = arith.constant 0 : index
    %c1_38 = arith.constant 1 : index
    %c0_39 = arith.constant 0 : index
    %40 = vector.load %arg6[%c0_37, %c1_38, %c0_39] : memref<1x2x128xf32, #tpu.memory_space<vmem>>, vector<1x1x128xf32>
    %41 = vector.shape_cast %40 : vector<1x1x128xf32> to vector<1x128xf32>
    %42 = vector.shape_cast %39 : vector<1x128xf32> to vector<1x1x128xf32>
    tpu.vector_store %arg6[%c0_37, %c1_38, %c0_39], %42 {strides = array<i32>} : memref<1x2x128xf32, #tpu.memory_space<vmem>>, vector<1x1x128xf32>,
    return
  }
  func.func @transform_0(%arg0: i32) -> (i32, i32, i32) {
    %c0_i32 = arith.constant 0 : i32
    %c0_i32_0 = arith.constant 0 : i32
    %c0_i32_1 = arith.constant 0 : i32
    return %arg0, %c0_i32, %c0_i32_0 : i32, i32, i32
  }
  func.func @transform_1(%arg0: i32) -> (i32, i32) {
    %c0_i32 = arith.constant 0 : i32
    %c0_i32_0 = arith.constant 0 : i32
    %c0_i32_1 = arith.constant 0 : i32
    return %c0_i32, %c0_i32_0 : i32, i32
  }
  func.func @transform_2(%arg0: i32) -> (i32, i32) {
    %c0_i32 = arith.constant 0 : i32
    %c0_i32_0 = arith.constant 0 : i32
    %c0_i32_1 = arith.constant 0 : i32
    return %c0_i32, %c0_i32_0 : i32, i32
  }
  func.func @transform_3(%arg0: i32) -> (i32, i32, i32) {
    %c0_i32 = arith.constant 0 : i32
    %c0_i32_0 = arith.constant 0 : i32
    %c0_i32_1 = arith.constant 0 : i32
    %c0_i32_2 = arith.constant 0 : i32
    return %c0_i32, %c0_i32_0, %c0_i32_1 : i32, i32, i32
  }
  func.func @transform_4(%arg0: i32) -> (i32, i32, i32) {
    %c0_i32 = arith.constant 0 : i32
    %c0_i32_0 = arith.constant 0 : i32
    %c0_i32_1 = arith.constant 0 : i32
    return %arg0, %c0_i32, %c0_i32_0 : i32, i32, i32
  }
  func.func @transform_5(%arg0: i32) -> (i32, i32, i32) {
    %c0_i32 = arith.constant 0 : i32
    %c0_i32_0 = arith.constant 0 : i32
    %c0_i32_1 = arith.constant 0 : i32
    return %arg0, %c0_i32, %c0_i32_0 : i32, i32, i32
  }
}

module attributes {stable_mosaic.version = 11 : i64} {
  func.func @bn_residual_relu_kernel(%arg0: i32, %arg1: memref<1x16x128xf32, #tpu.memory_space<vmem>>, %arg2: memref<1x16x128xf32, #tpu.memory_space<vmem>>, %arg3: memref<1x128xf32, #tpu.memory_space<vmem>>, %arg4: memref<1x128xf32, #tpu.memory_space<vmem>>, %arg5: memref<1x16x128xf32, #tpu.memory_space<vmem>>) attributes {dimension_semantics = [#tpu.dimension_semantics<parallel>], iteration_bounds = array<i64: 2>, scalar_prefetch = 0 : i64, scratch_operands = 0 : i64, tpu.core_type = #tpu.core_type<tc>, window_params = [{transform_indices = @transform_0, window_bounds = array<i64: 1, 16, 128>}, {transform_indices = @transform_1, window_bounds = array<i64: 1, 16, 128>}, {pipeline_mode = #tpu.pipeline_mode<synchronous>, transform_indices = @transform_2, window_bounds = array<i64: 1, 128>}, {pipeline_mode = #tpu.pipeline_mode<synchronous>, transform_indices = @transform_3, window_bounds = array<i64: 1, 128>}, {transform_indices = @transform_4, window_bounds = array<i64: 1, 16, 128>}]} {
    %c0 = arith.constant 0 : index
    %c0_0 = arith.constant 0 : index
    %c0_1 = arith.constant 0 : index
    %0 = vector.load %arg1[%c0, %c0_0, %c0_1] : memref<1x16x128xf32, #tpu.memory_space<vmem>>, vector<1x16x128xf32>
    %1 = vector.shape_cast %0 : vector<1x16x128xf32> to vector<16x128xf32>
    %c0_2 = arith.constant 0 : index
    %c0_3 = arith.constant 0 : index
    %2 = vector.load %arg3[%c0_2, %c0_3] : memref<1x128xf32, #tpu.memory_space<vmem>>, vector<1x128xf32>
    %3 = vector.broadcast %2 : vector<1x128xf32> to vector<16x128xf32>
    %4 = arith.mulf %1, %3 : vector<16x128xf32>
    %c0_4 = arith.constant 0 : index
    %c0_5 = arith.constant 0 : index
    %5 = vector.load %arg4[%c0_4, %c0_5] : memref<1x128xf32, #tpu.memory_space<vmem>>, vector<1x128xf32>
    %6 = vector.broadcast %5 : vector<1x128xf32> to vector<16x128xf32>
    %7 = arith.addf %4, %6 : vector<16x128xf32>
    %c0_6 = arith.constant 0 : index
    %c0_7 = arith.constant 0 : index
    %c0_8 = arith.constant 0 : index
    %8 = vector.load %arg2[%c0_6, %c0_7, %c0_8] : memref<1x16x128xf32, #tpu.memory_space<vmem>>, vector<1x16x128xf32>
    %9 = vector.shape_cast %8 : vector<1x16x128xf32> to vector<16x128xf32>
    %10 = arith.addf %7, %9 : vector<16x128xf32>
    %cst = arith.constant 0.000000e+00 : f32
    %11 = vector.broadcast %cst : f32 to vector<16x128xf32>
    %12 = arith.maximumf %10, %11 : vector<16x128xf32>
    %c0_9 = arith.constant 0 : index
    %c0_10 = arith.constant 0 : index
    %c0_11 = arith.constant 0 : index
    %13 = vector.load %arg5[%c0_9, %c0_10, %c0_11] : memref<1x16x128xf32, #tpu.memory_space<vmem>>, vector<1x16x128xf32>
    %14 = vector.shape_cast %13 : vector<1x16x128xf32> to vector<16x128xf32>
    %15 = vector.shape_cast %12 : vector<16x128xf32> to vector<1x16x128xf32>
    tpu.vector_store %arg5[%c0_9, %c0_10, %c0_11], %15 {strides = array<i32>} : memref<1x16x128xf32, #tpu.memory_space<vmem>>, vector<1x16x128xf32>,
    return
  }
  func.func @transform_0(%arg0: i32) -> (i32, i32, i32) {
    %c0_i32 = arith.constant 0 : i32
    %c0_i32_0 = arith.constant 0 : i32
    %c0_i32_1 = arith.constant 0 : i32
    return %arg0, %c0_i32, %c0_i32_0 : i32, i32, i32
  }
  func.func @transform_1(%arg0: i32) -> (i32, i32, i32) {
    %c0_i32 = arith.constant 0 : i32
    %c0_i32_0 = arith.constant 0 : i32
    %c0_i32_1 = arith.constant 0 : i32
    return %arg0, %c0_i32, %c0_i32_0 : i32, i32, i32
  }
  func.func @transform_2(%arg0: i32) -> (i32, i32) {
    %c0_i32 = arith.constant 0 : i32
    %c0_i32_0 = arith.constant 0 : i32
    %c0_i32_1 = arith.constant 0 : i32
    return %c0_i32, %c0_i32_0 : i32, i32
  }
  func.func @transform_3(%arg0: i32) -> (i32, i32) {
    %c0_i32 = arith.constant 0 : i32
    %c0_i32_0 = arith.constant 0 : i32
    %c0_i32_1 = arith.constant 0 : i32
    return %c0_i32, %c0_i32_0 : i32, i32
  }
  func.func @transform_4(%arg0: i32) -> (i32, i32, i32) {
    %c0_i32 = arith.constant 0 : i32
    %c0_i32_0 = arith.constant 0 : i32
    %c0_i32_1 = arith.constant 0 : i32
    return %arg0, %c0_i32, %c0_i32_0 : i32, i32, i32
  }
}

</mosaic_0001>

<llo_original>
// kernel: tile.38
$region0: #{tile.38}
  #allocation0 [shape = 's32[1]{0}', space=sflag, size = 0x4, scoped, tag = 'scoped memory for tile.38']
  %s0 = inlined_call_operand.vmem [shape: f32[8], index: 0, kind: input, shape index: {}]
  %s1 = inlined_call_operand.vmem [shape: f32[16,8], index: 1, kind: output, shape index: {}]
  // Predicated region
  $region2: #{tile.38} parent=0 // pred_check
    _
  $region3: #{tile.38} parent=0 // pred_check_branch
    %3 = sbr.rel (0) target = $region5
  $region4: #{tile.38} parent=0 // pred_region
    _
  $region5: #{tile.38} parent=0 // pred_fallthru
    _
  %v4 = vld [vmem:[%s0] ss:$0 sm:$0xff]
  %5 = vst [vmem:[%s1] sm:$0xff] %v4
  %s6 = scalar_lea.vmem %s1, 8
  %7 = vst [vmem:[%s6] sm:$0xff] %v4

// kernel: tile.39
$region0: #{tile.39}
  %s0 = inlined_call_operand.vmem [shape: f32[16,8], index: 0, kind: input, shape index: {}]
  %s1 = inlined_call_operand.vmem [shape: f32[1,128], index: 1, kind: output, shape index: {}]
  $region1: #{tile.39} parent=0
    #allocation0 [shape = 'u8[4096]{0}', space=vmem, size = 0x1000, scoped, tag = 'scoped mem for output reshape']
    %v2 = vld [vmem:[%s0] sm:$0x1]
    %vm3 = vcmask 64512
    %4 = vst.msk [vmem:[#allocation0] sm:$0x1] %vm3, %v2
    %s5 = scalar_lea.vmem %s0, 15
    %v6 = vld [vmem:[%s5] sm:$0x1]
    %7 = vrot.lane.b32.xlu0 %v6, 120
    %v8 = vpop.permute.xlu0 %7
    %vm9 = vcmask 1048512
    %10 = vst.msk [vmem:[#allocation0] sm:$0x1] %vm9, %v8
    %s11 = scalar_lea.vmem %s0, 14
    %v12 = vld [vmem:[%s11] sm:$0x1]
    %13 = vrot.lane.b32.xlu0 %v12, 112
    %v14 = vpop.permute.xlu0 %13
    %vm15 = vcmask 982912
    %16 = vst.msk [vmem:[#allocation0] sm:$0x1] %vm15, %v14
    %s17 = scalar_lea.vmem %s0, 13
    %v18 = vld [vmem:[%s17] sm:$0x1]
    %19 = vrot.lane.b32.xlu0 %v18, 104
    %v20 = vpop.permute.xlu0 %19
    %vm21 = vcmask 917312
    %22 = vst.msk [vmem:[#allocation0] sm:$0x1] %vm21, %v20
    %s23 = scalar_lea.vmem %s0, 12
    %v24 = vld [vmem:[%s23] sm:$0x1]
    %25 = vrot.lane.b32.xlu0 %v24, 96
    %v26 = vpop.permute.xlu0 %25
    %vm27 = vcmask 851712
    %28 = vst.msk [vmem:[#allocation0] sm:$0x1] %vm27, %v26
    %s29 = scalar_lea.vmem %s0, 11
    %v30 = vld [vmem:[%s29] sm:$0x1]
    %31 = vrot.lane.b32.xlu0 %v30, 88
    %v32 = vpop.permute.xlu0 %31
    %vm33 = vcmask 786112
    %34 = vst.msk [vmem:[#allocation0] sm:$0x1] %vm33, %v32
    %s35 = scalar_lea.vmem %s0, 10
    %v36 = vld [vmem:[%s35] sm:$0x1]
    %37 = vrot.lane.b32.xlu0 %v36, 80
    %v38 = vpop.permute.xlu0 %37
    %vm39 = vcmask 720512
    %40 = vst.msk [vmem:[#allocation0] sm:$0x1] %vm39, %v38
    %s41 = scalar_lea.vmem %s0, 9
    %v42 = vld [vmem:[%s41] sm:$0x1]
    %43 = vrot.lane.b32.xlu0 %v42, 72
    %v44 = vpop.permute.xlu0 %43
    %vm45 = vcmask 654912
    %46 = vst.msk [vmem:[#allocation0] sm:$0x1] %vm45, %v44
    %s47 = scalar_lea.vmem %s0, 8
    %v48 = vld [vmem:[%s47] sm:$0x1]
    %49 = vrot.lane.b32.xlu0 %v48, 64
    %v50 = vpop.permute.xlu0 %49
    %vm51 = vcmask 589312
    %52 = vst.msk [vmem:[#allocation0] sm:$0x1] %vm51, %v50
    %s53 = scalar_lea.vmem %s0, 7
    %v54 = vld [vmem:[%s53] sm:$0x1]
    %55 = vrot.lane.b32.xlu0 %v54, 56
    %v56 = vpop.permute.xlu0 %55
    %vm57 = vcmask 523712
    %58 = vst.msk [vmem:[#allocation0] sm:$0x1] %vm57, %v56
    %s59 = scalar_lea.vmem %s0, 6
    %v60 = vld [vmem:[%s59] sm:$0x1]
    %61 = vrot.lane.b32.xlu0 %v60, 48
    %v62 = vpop.permute.xlu0 %61
    %vm63 = vcmask 458112
    %64 = vst.msk [vmem:[#allocation0] sm:$0x1] %vm63, %v62
    %s65 = scalar_lea.vmem %s0, 5
    %v66 = vld [vmem:[%s65] sm:$0x1]
    %67 = vrot.lane.b32.xlu0 %v66, 40
    %v68 = vpop.permute.xlu0 %67
    %vm69 = vcmask 392512
    %70 = vst.msk [vmem:[#allocation0] sm:$0x1] %vm69, %v68
    %s71 = scalar_lea.vmem %s0, 4
    %v72 = vld [vmem:[%s71] sm:$0x1]
    %73 = vrot.lane.b32.xlu0 %v72, 32
    %v74 = vpop.permute.xlu0 %73
    %vm75 = vcmask 326912
    %76 = vst.msk [vmem:[#allocation0] sm:$0x1] %vm75, %v74
    %s77 = scalar_lea.vmem %s0, 3
    %v78 = vld [vmem:[%s77] sm:$0x1]
    %79 = vrot.lane.b32.xlu0 %v78, 24
    %v80 = vpop.permute.xlu0 %79
    %vm81 = vcmask 261312
    %82 = vst.msk [vmem:[#allocation0] sm:$0x1] %vm81, %v80
    %s83 = scalar_lea.vmem %s0, 2
    %v84 = vld [vmem:[%s83] sm:$0x1]
    %85 = vrot.lane.b32.xlu0 %v84, 16
    %v86 = vpop.permute.xlu0 %85
    %vm87 = vcmask 195712
    %88 = vst.msk [vmem:[#allocation0] sm:$0x1] %vm87, %v86
    %s89 = scalar_lea.vmem %s0, 1
    %v90 = vld [vmem:[%s89] sm:$0x1]
    %91 = vrot.lane.b32.xlu0 %v90, 8
    %v92 = vpop.permute.xlu0 %91
    %vm93 = vcmask 130112
    %94 = vst.msk [vmem:[#allocation0] sm:$0x1] %vm93, %v92
    %s96 = sshll.u32 1, 1
    %s97 = ssub.s32 %s96, 1
    %v99 = vld [vmem:[#allocation0] sm:%s97]
    %s100 = sshll.u32 1, 1
    %s101 = ssub.s32 %s100, 1
    %102 = vst [vmem:[%s1] sm:%s101] %v99

// kernel: basic_res_block.3
$region0: #{basic_res_block.3}
  #allocation0 [shape = 'u32[]', space=smem, size = 0x4, offset = 0x4, fixed_abs, tag = 'smem constant byte address 0x4 - core index']
  #allocation1 [shape = 'u32[144,128]{1,0:T(1,128)}', space=vmem, size = 0x12000, scoped, tag = 'internal scratch']
  #allocation2 [shape = 'f32[18,64]{1,0:T(8,128)}', space=vmem, size = 0x3000, scoped, tag = 'scratch operand']
  %s0 = inlined_call_operand.vmem [shape: f32[2,16,64], index: 0, kind: input, shape index: {}]
  %s1 = inlined_call_operand.vmem [shape: f32[3,64,128], index: 1, kind: input, shape index: {}]
  %s2 = inlined_call_operand.vmem [shape: f32[2,16,128], index: 2, kind: output, shape index: {0}]
  %s3 = inlined_call_operand.vmem [shape: f32[2,2,128], index: 3, kind: output, shape index: {1}]
  %4 = xla_tuple %s2, %s3
  %s5 = sld [smem:[#allocation0]]
  $region49: #{basic_res_block.3} parent=0
    _
  %s7 = ssub.s32 1, %s5
  %s8 = scalar_select 0, %s7, %s5
  loop: start=0, step=1, limit=4
  $region2: #{basic_res_block.3} parent=0 // loop_pre_header
    _
  $region3: #{basic_res_block.3} parent=0 // loop_header
    %s10 = sphi 0, %s14
    %p11 = scmp.ge.s32.totalorder %s10, 4
    %s20 = sphi 0, %s22
    %s23 = sphi 0, %s20
    %s24 = sphi 0, %s23
    %s40 = sphi 0, %s24
    %s44 = sphi 0, %s44
    %s46 = sphi 0, %s44
    %s47 = sphi 0, %s46
    %s61 = sphi 0, %s47
    %s67 = sphi 0, %s69
    %s70 = sphi 0, %s67
    %s71 = sphi 0, %s70
    %s87 = sphi 0, %s71
    %s93 = sphi 0, %s95
    %s96 = sphi 0, %s93
    %s97 = sphi 0, %s96
    %s113 = sphi 0, %s97
  $region4: #{basic_res_block.3} parent=0 // loop_header_branch
    %13 = sbr.rel (%p11) target = $region8
  $region5: #{basic_res_block.3} parent=0 // loop_body
    %s15 = ssub.s32 %s10, 1
    %s16 = ssub.s32 %s10, 2
    %s17 = sadd.s32 %s10, 1
    %s18 = ssub.s32 %s10, %s17
    %p19 = scmp.eq.s32.totalorder %s18, 0
    %s21 = sadd.s32 %s20, 1
    %s22 = scalar_select %p19, %s20, %s21
    %p25 = pneg %p19
    %p26 = scmp.eq.s32.totalorder %s10, 1
    %p27 = por %p25, %p26
    %p28 = scmp.ne.s32.totalorder %s20, %s23
    %p29 = scmp.eq.s32.totalorder %s10, 0
    %p30 = por %p28, %p29
    %p31 = scmp.ne.s32.totalorder %s20, %s23
    %p32 = scmp.eq.s32.totalorder %s15, 1
    %p33 = por %p31, %p32
    %p34 = scmp.ne.s32.totalorder %s23, %s24
    %p35 = scmp.eq.s32.totalorder %s15, 0
    %p36 = por %p34, %p35
    %p37 = scmp.ne.s32.totalorder %s23, %s24
    %p38 = scmp.eq.s32.totalorder %s16, 1
    %p39 = por %p37, %p38
    %p41 = scmp.ne.s32.totalorder %s24, %s40
    %p42 = scmp.eq.s32.totalorder %s16, 0
    %p43 = por %p41, %p42
    %s45 = sadd.s32 %s44, 1
    %p48 = scmp.eq.s32.totalorder %s10, 1
    %p49 = scmp.ne.s32.totalorder %s44, %s46
    %p50 = scmp.eq.s32.totalorder %s10, 0
    %p51 = por %p49, %p50
    %p52 = scmp.ne.s32.totalorder %s44, %s46
    %p53 = scmp.eq.s32.totalorder %s15, 1
    %p54 = por %p52, %p53
    %p55 = scmp.ne.s32.totalorder %s46, %s47
    %p56 = scmp.eq.s32.totalorder %s15, 0
    %p57 = por %p55, %p56
    %p58 = scmp.ne.s32.totalorder %s46, %s47
    %p59 = scmp.eq.s32.totalorder %s16, 1
    %p60 = por %p58, %p59
    %p62 = scmp.ne.s32.totalorder %s47, %s61
    %p63 = scmp.eq.s32.totalorder %s16, 0
    %p64 = por %p62, %p63
    %s65 = ssub.s32 %s10, %s17
    %p66 = scmp.eq.s32.totalorder %s65, 0
    %s68 = sadd.s32 %s67, 1
    %s69 = scalar_select %p66, %s67, %s68
    %p72 = pneg %p66
    %p73 = scmp.eq.s32.totalorder %s10, 1
    %p74 = por %p72, %p73
    %p75 = scmp.ne.s32.totalorder %s67, %s70
    %p76 = scmp.eq.s32.totalorder %s10, 0
    %p77 = por %p75, %p76
    %p78 = scmp.ne.s32.totalorder %s67, %s70
    %p79 = scmp.eq.s32.totalorder %s15, 1
    %p80 = por %p78, %p79
    %p81 = scmp.ne.s32.totalorder %s70, %s71
    %p82 = scmp.eq.s32.totalorder %s15, 0
    %p83 = por %p81, %p82
    %p84 = scmp.ne.s32.totalorder %s70, %s71
    %p85 = scmp.eq.s32.totalorder %s16, 1
    %p86 = por %p84, %p85
    %p88 = scmp.ne.s32.totalorder %s71, %s87
    %p89 = scmp.eq.s32.totalorder %s16, 0
    %p90 = por %p88, %p89
    %s91 = ssub.s32 %s10, %s17
    %p92 = scmp.eq.s32.totalorder %s91, 0
    %s94 = sadd.s32 %s93, 1
    %s95 = scalar_select %p92, %s93, %s94
    %p98 = pneg %p92
    %p99 = scmp.eq.s32.totalorder %s10, 1
    %p100 = por %p98, %p99
    %p101 = scmp.ne.s32.totalorder %s93, %s96
    %p102 = scmp.eq.s32.totalorder %s10, 0
    %p103 = por %p101, %p102
    %p104 = scmp.ne.s32.totalorder %s93, %s96
    %p105 = scmp.eq.s32.totalorder %s15, 1
    %p106 = por %p104, %p105
    %p107 = scmp.ne.s32.totalorder %s96, %s97
    %p108 = scmp.eq.s32.totalorder %s15, 0
    %p109 = por %p107, %p108
    %p110 = scmp.ne.s32.totalorder %s96, %s97
    %p111 = scmp.eq.s32.totalorder %s16, 1
    %p112 = por %p110, %p111
    %p114 = scmp.ne.s32.totalorder %s97, %s113
    %p115 = scmp.eq.s32.totalorder %s16, 0
    %p116 = por %p114, %p115
    %p117 = scmp.le.s32.totalorder 1, %s10
    %p118 = scmp.lt.s32.totalorder %s10, 3
    %p119 = pnand %p117, %p118
    %p120 = pneg %p119
    // Predicated region
    $region9: #{basic_res_block.3} parent=5 // pred_check
      _
    $region10: #{basic_res_block.3} parent=5 // pred_check_branch
      %122 = sbr.rel (%p119) target = $region12
    $region11: #{basic_res_block.3} parent=5 // pred_region
      %s123 = ssub.s32 %s10, 1
      // Predicated region
      $region13: #{basic_res_block.3} parent=11 // pred_check
        %p124 = pneg %p57
      $region14: #{basic_res_block.3} parent=11 // pred_check_branch
        %126 = sbr.rel (%p124) target = $region16
      $region15: #{basic_res_block.3} parent=11 // pred_region
        _
      $region16: #{basic_res_block.3} parent=11 // pred_fallthru
        _
    $region12: #{basic_res_block.3} parent=5 // pred_fallthru
      _
    %p127 = scmp.lt.s32.totalorder %s10, 2
    // Predicated region
    $region17: #{basic_res_block.3} parent=5 // pred_check
      %p128 = pneg %p127
    $region18: #{basic_res_block.3} parent=5 // pred_check_branch
      %130 = sbr.rel (%p128) target = $region20
    $region19: #{basic_res_block.3} parent=5 // pred_region
      // Predicated region
      $region21: #{basic_res_block.3} parent=19 // pred_check
        %p131 = pneg %p30
      $region22: #{basic_res_block.3} parent=19 // pred_check_branch
        %133 = sbr.rel (%p131) target = $region24
      $region23: #{basic_res_block.3} parent=19 // pred_region
        %p134 = scmp.lt.s32.totalorder %s10, 1
        %s135 = scalar_select %p134, %s10, 1
        %s136 = smul.addr %s135, 2
        %s137 = smul.addr %s136, 8
        %s138 = scalar_lea.vmem %s0, %s137
      $region24: #{basic_res_block.3} parent=19 // pred_fallthru
        _
    $region20: #{basic_res_block.3} parent=5 // pred_fallthru
      _
    %p139 = scmp.le.s32.totalorder 1, %s10
    %p140 = scmp.lt.s32.totalorder %s10, 3
    %p141 = pnand %p139, %p140
    %p142 = pneg %p141
    // Predicated region
    $region25: #{basic_res_block.3} parent=5 // pred_check
      _
    $region26: #{basic_res_block.3} parent=5 // pred_check_branch
      %144 = sbr.rel (%p141) target = $region28
    $region27: #{basic_res_block.3} parent=5 // pred_region
      %s145 = ssub.s32 %s10, 1
      %p146 = scmp.lt.s32.totalorder %s15, 1
      %s147 = scalar_select %p146, %s15, 1
      %s148 = smul.addr %s147, 2
      %s149 = smul.addr %s148, 8
      %s150 = scalar_lea.vmem %s0, %s149
      %p151 = pneg %p36
      %p152 = pneg %p33
      %p153 = pneg %p57
      %p154 = pneg %p54
      %p155 = pneg %p83
      %p156 = pneg %p80
      %p157 = scmp.lt.s32.totalorder %s15, 1
      %s158 = scalar_select %p157, %s15, 1
      %s159 = smul.addr %s158, 2
      %s160 = smul.addr %s159, 8
      %s161 = scalar_lea.vmem %s2, %s160
      %p162 = pneg %p109
      %p163 = pneg %p106
      %p164 = scmp.lt.s32.totalorder %s15, 1
      %s165 = scalar_select %p164, %s15, 1
      %s166 = smul.addr %s165, 2
      %s167 = scalar_lea.vmem %s3, %s166
      %p168 = scmp.lt.s32.totalorder %s15, 1
      %s169 = scalar_select %p168, %s15, 1
      %s170 = smul.addr %s169, 2
      %s171 = smul.addr %s170, 8
      %s172 = scalar_lea.vmem %s0, %s171
      %p173 = scmp.lt.s32.totalorder %s15, 1
      %s174 = scalar_select %p173, %s15, 1
      %s175 = smul.addr %s174, 2
      %s176 = smul.addr %s175, 8
      %s177 = scalar_lea.vmem %s2, %s176
      %p178 = scmp.lt.s32.totalorder %s15, 1
      %s179 = scalar_select %p178, %s15, 1
      %s180 = smul.addr %s179, 2
      %s181 = scalar_lea.vmem %s3, %s180
      %vm182 = vcmask 516096
      %183 = vst.msk [vmem:[#allocation2] sm:$0x1] %vm182, 0.0
      %184 = vst.msk [vmem:[#allocation2 + $0x11] sm:$0x1] %vm182, 0.0
      %v185 = vld [vmem:[%s172] sm:$0xff]
      %v186 = vld [vmem:[%s172 + $0x8] sm:$0xff]
      %vm187 = vcmask 523264
      %188 = vst.msk [vmem:[#allocation2 + $0x1] sm:$0xff] %vm187, %v185
      %189 = vst.msk [vmem:[#allocation2 + $0x9] sm:$0xff] %vm187, %v186
      %v190 = vld [vmem:[#allocation2] sm:$0xff]
      %v191 = vld [vmem:[#allocation2 + $0x8] sm:$0xff]
      %v192 = vld [vmem:[%s1] sm:$0xff]
      %v193 = vld [vmem:[%s1 + $0x8] sm:$0xff]
      %v194 = vld [vmem:[%s1 + $0x10] sm:$0xff]
      %v195 = vld [vmem:[%s1 + $0x18] sm:$0xff]
      %v196 = vld [vmem:[%s1 + $0x20] sm:$0xff]
      %v197 = vld [vmem:[%s1 + $0x28] sm:$0xff]
      %v198 = vld [vmem:[%s1 + $0x30] sm:$0xff]
      %v199 = vld [vmem:[%s1 + $0x38] sm:$0xff]
      %v200 = vld [vmem:[#allocation2 + $0x1] sm:$0xff]
      %v201 = vld [vmem:[#allocation2 + $0x9] sm:$0xff]
      %s202 = scalar_lea.vmem %s1, 64
      %v203 = vld [vmem:[%s202] sm:$0xff]
      %v204 = vld [vmem:[%s202 + $0x8] sm:$0xff]
      %v205 = vld [vmem:[%s202 + $0x10] sm:$0xff]
      %v206 = vld [vmem:[%s202 + $0x18] sm:$0xff]
      %v207 = vld [vmem:[%s202 + $0x20] sm:$0xff]
      %v208 = vld [vmem:[%s202 + $0x28] sm:$0xff]
      %v209 = vld [vmem:[%s202 + $0x30] sm:$0xff]
      %v210 = vld [vmem:[%s202 + $0x38] sm:$0xff]
      %v212 = vsel %vm187, %v200, 0
      %v215 = vsel %vm187, %v201, 0
      %217 = vmatprep.subr.mxu0 0.0
      %218 = vmatpush1.msra.mxu0 0.0
      %219 = vmatprep.subr.mxu0 0.0
      %220 = vmatpush1.msra.mxu0 0.0
      %221 = vmatprep.subr.mxu0 0.0
      %222 = vmatpush1.msra.mxu0 0.0
      %223 = vmatprep.subr.mxu0 0.0
      %224 = vmatpush1.msra.mxu0 0.0
      %225 = vmatprep.subr.mxu0 0.0
      %226 = vmatpush1.msra.mxu0 0.0
      %227 = vmatprep.subr.mxu0 0.0
      %228 = vmatpush1.msra.mxu0 0.0
      %229 = vmatprep.subr.mxu0 0.0
      %230 = vmatpush1.msra.mxu0 0.0
      %231 = vmatprep.subr.mxu0 0.0
      %232 = vmatpush1.msra.mxu0 0.0
      %233 = vmatprep.subr.mxu0 0.0
      %234 = vmatpush1.msra.mxu0 %v210
      %235 = vmatprep.subr.mxu0 0.0
      %236 = vmatpush1.msra.mxu0 %v209
      %237 = vmatprep.subr.mxu0 0.0
      %238 = vmatpush1.msra.mxu0 %v208
      %239 = vmatprep.subr.mxu0 0.0
      %240 = vmatpush1.msra.mxu0 %v207
      %241 = vmatprep.subr.mxu0 0.0
      %242 = vmatpush1.msra.mxu0 %v206
      %243 = vmatprep.subr.mxu0 0.0
      %244 = vmatpush1.msra.mxu0 %v205
      %245 = vmatprep.subr.mxu0 0.0
      %246 = vmatpush1.msra.mxu0 %v204
      %247 = vmatprep.subr.mxu0 0.0
      %248 = vmatpush1.msra.mxu0 %v203
      %249 = vmatprep.subr.mxu0 0.0
      %250 = vmatpush2.msra.mxu0 0.0
      %251 = vmatprep.subr.mxu0 0.0
      %252 = vmatpush2.msra.mxu0 0.0
      %253 = vmatprep.subr.mxu0 0.0
      %254 = vmatpush2.msra.mxu0 0.0
      %255 = vmatprep.subr.mxu0 0.0
      %256 = vmatpush2.msra.mxu0 0.0
      %257 = vmatprep.subr.mxu0 0.0
      %258 = vmatpush2.msra.mxu0 0.0
      %259 = vmatprep.subr.mxu0 0.0
      %260 = vmatpush2.msra.mxu0 0.0
      %261 = vmatprep.subr.mxu0 0.0
      %262 = vmatpush2.msra.mxu0 0.0
      %263 = vmatprep.subr.mxu0 0.0
      %264 = vmatpush2.msra.mxu0 0.0
      %265 = vmatprep.subr.mxu0 0.0
      %266 = vmatpush2.msra.mxu0 0.0
      %267 = vmatprep.subr.mxu0 0.0
      %268 = vmatpush2.msra.mxu0 0.0
      %269 = vmatprep.subr.mxu0 0.0
      %270 = vmatpush2.msra.mxu0 0.0
      %271 = vmatprep.subr.mxu0 0.0
      %272 = vmatpush2.msra.mxu0 0.0
      %273 = vmatprep.subr.mxu0 0.0
      %274 = vmatpush2.msra.mxu0 0.0
      %275 = vmatprep.subr.mxu0 0.0
      %276 = vmatpush2.msra.mxu0 0.0
      %277 = vmatprep.subr.mxu0 0.0
      %278 = vmatpush2.msra.mxu0 0.0
      %279 = vmatprep.subr.mxu0 0.0
      %280 = vmatpush2.msra.mxu0 0.0
      %281 = vmatprep.mubr.f32.mxu0 0.0
      %282 = vmatmul.mubr.f32.gmra.mxu0 %v212
      %v283 = vpop.f32.mrf.mxu0
      %v284 = vadd.f32 0.0, %v283
      %v285 = vpop.f32.mrf.mxu0
      %286 = vmatprep.mubr.f32.mxu0 0.0
      %287 = vmatmul.mubr.f32.gmra.mxu0 %v215
      %v288 = vpop.f32.mrf.mxu0
      %v289 = vadd.f32 0.0, %v288
      %v290 = vpop.f32.mrf.mxu0
      %291 = vdwg.mxu0
      %v293 = vsel %vm187, %v190, 0
      %v296 = vsel %vm187, %v191, 0
      %298 = vmatprep.subr.mxu0 0.0
      %299 = vmatpush1.msra.mxu0 0.0
      %300 = vmatprep.subr.mxu0 0.0
      %301 = vmatpush1.msra.mxu0 0.0
      %302 = vmatprep.subr.mxu0 0.0
      %303 = vmatpush1.msra.mxu0 0.0
      %304 = vmatprep.subr.mxu0 0.0
      %305 = vmatpush1.msra.mxu0 0.0
      %306 = vmatprep.subr.mxu0 0.0
      %307 = vmatpush1.msra.mxu0 0.0
      %308 = vmatprep.subr.mxu0 0.0
      %309 = vmatpush1.msra.mxu0 0.0
      %310 = vmatprep.subr.mxu0 0.0
      %311 = vmatpush1.msra.mxu0 0.0
      %312 = vmatprep.subr.mxu0 0.0
      %313 = vmatpush1.msra.mxu0 0.0
      %314 = vmatprep.subr.mxu0 0.0
      %315 = vmatpush1.msra.mxu0 %v199
      %316 = vmatprep.subr.mxu0 0.0
      %317 = vmatpush1.msra.mxu0 %v198
      %318 = vmatprep.subr.mxu0 0.0
      %319 = vmatpush1.msra.mxu0 %v197
      %320 = vmatprep.subr.mxu0 0.0
      %321 = vmatpush1.msra.mxu0 %v196
      %322 = vmatprep.subr.mxu0 0.0
      %323 = vmatpush1.msra.mxu0 %v195
      %324 = vmatprep.subr.mxu0 0.0
      %325 = vmatpush1.msra.mxu0 %v194
      %326 = vmatprep.subr.mxu0 0.0
      %327 = vmatpush1.msra.mxu0 %v193
      %328 = vmatprep.subr.mxu0 0.0
      %329 = vmatpush1.msra.mxu0 %v192
      %330 = vmatprep.subr.mxu0 0.0
      %331 = vmatpush2.msra.mxu0 0.0
      %332 = vmatprep.subr.mxu0 0.0
      %333 = vmatpush2.msra.mxu0 0.0
      %334 = vmatprep.subr.mxu0 0.0
      %335 = vmatpush2.msra.mxu0 0.0
      %336 = vmatprep.subr.mxu0 0.0
      %337 = vmatpush2.msra.mxu0 0.0
      %338 = vmatprep.subr.mxu0 0.0
      %339 = vmatpush2.msra.mxu0 0.0
      %340 = vmatprep.subr.mxu0 0.0
      %341 = vmatpush2.msra.mxu0 0.0
      %342 = vmatprep.subr.mxu0 0.0
      %343 = vmatpush2.msra.mxu0 0.0
      %344 = vmatprep.subr.mxu0 0.0
      %345 = vmatpush2.msra.mxu0 0.0
      %346 = vmatprep.subr.mxu0 0.0
      %347 = vmatpush2.msra.mxu0 0.0
      %348 = vmatprep.subr.mxu0 0.0
      %349 = vmatpush2.msra.mxu0 0.0
      %350 = vmatprep.subr.mxu0 0.0
      %351 = vmatpush2.msra.mxu0 0.0
      %352 = vmatprep.subr.mxu0 0.0
      %353 = vmatpush2.msra.mxu0 0.0
      %354 = vmatprep.subr.mxu0 0.0
      %355 = vmatpush2.msra.mxu0 0.0
      %356 = vmatprep.subr.mxu0 0.0
      %357 = vmatpush2.msra.mxu0 0.0
      %358 = vmatprep.subr.mxu0 0.0
      %359 = vmatpush2.msra.mxu0 0.0
      %360 = vmatprep.subr.mxu0 0.0
      %361 = vmatpush2.msra.mxu0 0.0
      %362 = vmatprep.mubr.f32.mxu0 0.0
      %363 = vmatmul.mubr.f32.gmra.mxu0 %v293
      %v364 = vpop.f32.mrf.mxu0
      %v365 = vadd.f32 %v284, %v364
      %v366 = vpop.f32.mrf.mxu0
      %367 = vmatprep.mubr.f32.mxu0 0.0
      %368 = vmatmul.mubr.f32.gmra.mxu0 %v296
      %v369 = vpop.f32.mrf.mxu0
      %v370 = vadd.f32 %v289, %v369
      %v371 = vpop.f32.mrf.mxu0
      %372 = vdwg.mxu0
      %v373 = vld [vmem:[#allocation2 + $0x2] sm:$0xff]
      %v374 = vld [vmem:[#allocation2 + $0xa] sm:$0xff]
      %s375 = scalar_lea.vmem %s1, 128
      %v376 = vld [vmem:[%s375] sm:$0xff]
      %v377 = vld [vmem:[%s375 + $0x8] sm:$0xff]
      %v378 = vld [vmem:[%s375 + $0x10] sm:$0xff]
      %v379 = vld [vmem:[%s375 + $0x18] sm:$0xff]
      %v380 = vld [vmem:[%s375 + $0x20] sm:$0xff]
      %v381 = vld [vmem:[%s375 + $0x28] sm:$0xff]
      %v382 = vld [vmem:[%s375 + $0x30] sm:$0xff]
      %v383 = vld [vmem:[%s375 + $0x38] sm:$0xff]
      %v385 = vsel %vm187, %v373, 0
      %v388 = vsel %vm187, %v374, 0
      %390 = vmatprep.subr.mxu0 0.0
      %391 = vmatpush1.msra.mxu0 0.0
      %392 = vmatprep.subr.mxu0 0.0
      %393 = vmatpush1.msra.mxu0 0.0
      %394 = vmatprep.subr.mxu0 0.0
      %395 = vmatpush1.msra.mxu0 0.0
      %396 = vmatprep.subr.mxu0 0.0
      %397 = vmatpush1.msra.mxu0 0.0
      %398 = vmatprep.subr.mxu0 0.0
      %399 = vmatpush1.msra.mxu0 0.0
      %400 = vmatprep.subr.mxu0 0.0
      %401 = vmatpush1.msra.mxu0 0.0
      %402 = vmatprep.subr.mxu0 0.0
      %403 = vmatpush1.msra.mxu0 0.0
      %404 = vmatprep.subr.mxu0 0.0
      %405 = vmatpush1.msra.mxu0 0.0
      %406 = vmatprep.subr.mxu0 0.0
      %407 = vmatpush1.msra.mxu0 %v383
      %408 = vmatprep.subr.mxu0 0.0
      %409 = vmatpush1.msra.mxu0 %v382
      %410 = vmatprep.subr.mxu0 0.0
      %411 = vmatpush1.msra.mxu0 %v381
      %412 = vmatprep.subr.mxu0 0.0
      %413 = vmatpush1.msra.mxu0 %v380
      %414 = vmatprep.subr.mxu0 0.0
      %415 = vmatpush1.msra.mxu0 %v379
      %416 = vmatprep.subr.mxu0 0.0
      %417 = vmatpush1.msra.mxu0 %v378
      %418 = vmatprep.subr.mxu0 0.0
      %419 = vmatpush1.msra.mxu0 %v377
      %420 = vmatprep.subr.mxu0 0.0
      %421 = vmatpush1.msra.mxu0 %v376
      %422 = vmatprep.subr.mxu0 0.0
      %423 = vmatpush2.msra.mxu0 0.0
      %424 = vmatprep.subr.mxu0 0.0
      %425 = vmatpush2.msra.mxu0 0.0
      %426 = vmatprep.subr.mxu0 0.0
      %427 = vmatpush2.msra.mxu0 0.0
      %428 = vmatprep.subr.mxu0 0.0
      %429 = vmatpush2.msra.mxu0 0.0
      %430 = vmatprep.subr.mxu0 0.0
      %431 = vmatpush2.msra.mxu0 0.0
      %432 = vmatprep.subr.mxu0 0.0
      %433 = vmatpush2.msra.mxu0 0.0
      %434 = vmatprep.subr.mxu0 0.0
      %435 = vmatpush2.msra.mxu0 0.0
      %436 = vmatprep.subr.mxu0 0.0
      %437 = vmatpush2.msra.mxu0 0.0
      %438 = vmatprep.subr.mxu0 0.0
      %439 = vmatpush2.msra.mxu0 0.0
      %440 = vmatprep.subr.mxu0 0.0
      %441 = vmatpush2.msra.mxu0 0.0
      %442 = vmatprep.subr.mxu0 0.0
      %443 = vmatpush2.msra.mxu0 0.0
      %444 = vmatprep.subr.mxu0 0.0
      %445 = vmatpush2.msra.mxu0 0.0
      %446 = vmatprep.subr.mxu0 0.0
      %447 = vmatpush2.msra.mxu0 0.0
      %448 = vmatprep.subr.mxu0 0.0
      %449 = vmatpush2.msra.mxu0 0.0
      %450 = vmatprep.subr.mxu0 0.0
      %451 = vmatpush2.msra.mxu0 0.0
      %452 = vmatprep.subr.mxu0 0.0
      %453 = vmatpush2.msra.mxu0 0.0
      %454 = vmatprep.mubr.f32.mxu0 0.0
      %455 = vmatmul.mubr.f32.gmra.mxu0 %v385
      %v456 = vpop.f32.mrf.mxu0
      %v457 = vadd.f32 0.0, %v456
      %v458 = vpop.f32.mrf.mxu0
      %459 = vmatprep.mubr.f32.mxu0 0.0
      %460 = vmatmul.mubr.f32.gmra.mxu0 %v388
      %v461 = vpop.f32.mrf.mxu0
      %v462 = vadd.f32 0.0, %v461
      %v463 = vpop.f32.mrf.mxu0
      %464 = vdwg.mxu0
      %v465 = vadd.f32 %v365, %v457
      %v466 = vadd.f32 %v370, %v462
      %467 = vst [vmem:[%s177] sm:$0xff] %v465
      %468 = vst [vmem:[%s177 + $0x8] sm:$0xff] %v466
      %v469 = vadd.f32 %v465, %v466
      %v470 = vrot.slane %v469, 4
      %v471 = vadd.f32 %v469, %v470
      %v472 = vrot.slane %v471, 2
      %v473 = vadd.f32 %v471, %v472
      %v474 = vrot.slane %v473, 1
      %v475 = vadd.f32 %v473, %v474
      %476 = vst [vmem:[%s181] sm:$0x1] %v475
      %v477 = vmul.f32 %v465, %v465
      %v478 = vmul.f32 %v466, %v466
      %v479 = vadd.f32 %v477, %v478
      %v480 = vrot.slane %v479, 4
      %v481 = vadd.f32 %v479, %v480
      %v482 = vrot.slane %v481, 2
      %v483 = vadd.f32 %v481, %v482
      %v484 = vrot.slane %v483, 1
      %v485 = vadd.f32 %v483, %v484
      %486 = vst [vmem:[%s181 + $0x1] sm:$0x1] %v485
      %p487 = scmp.lt.s32.totalorder %s15, 1
      %s488 = scalar_select %p487, %s15, 1
      %s489 = smul.addr %s488, 2
      %s490 = smul.addr %s489, 8
      %s491 = scalar_lea.vmem %s2, %s490
      %p492 = scmp.lt.s32.totalorder %s15, 1
      %s493 = scalar_select %p492, %s15, 1
      %s494 = smul.addr %s493, 2
      %s495 = scalar_lea.vmem %s3, %s494
      // Predicated region
      $region29: #{basic_res_block.3} parent=27 // pred_check
        %p496 = pneg %p80
      $region30: #{basic_res_block.3} parent=27 // pred_check_branch
        %498 = sbr.rel (%p496) target = $region32
      $region31: #{basic_res_block.3} parent=27 // pred_region
        _
      $region32: #{basic_res_block.3} parent=27 // pred_fallthru
        _
      // Predicated region
      $region33: #{basic_res_block.3} parent=27 // pred_check
        %p499 = pneg %p106
      $region34: #{basic_res_block.3} parent=27 // pred_check_branch
        %501 = sbr.rel (%p499) target = $region36
      $region35: #{basic_res_block.3} parent=27 // pred_region
        _
      $region36: #{basic_res_block.3} parent=27 // pred_fallthru
        _
    $region28: #{basic_res_block.3} parent=5 // pred_fallthru
      _
    %p502 = scmp.le.s32.totalorder 2, %s10
    // Predicated region
    $region37: #{basic_res_block.3} parent=5 // pred_check
      %p503 = pneg %p502
    $region38: #{basic_res_block.3} parent=5 // pred_check_branch
      %505 = sbr.rel (%p503) target = $region40
    $region39: #{basic_res_block.3} parent=5 // pred_region
      %s506 = ssub.s32 %s10, 2
      // Predicated region
      $region41: #{basic_res_block.3} parent=39 // pred_check
        %p507 = pneg %p86
      $region42: #{basic_res_block.3} parent=39 // pred_check_branch
        %509 = sbr.rel (%p507) target = $region44
      $region43: #{basic_res_block.3} parent=39 // pred_region
        %p510 = scmp.lt.s32.totalorder %s16, 1
        %s511 = scalar_select %p510, %s16, 1
        %s512 = smul.addr %s511, 2
        %s513 = smul.addr %s512, 8
        %s514 = scalar_lea.vmem %s2, %s513
      $region44: #{basic_res_block.3} parent=39 // pred_fallthru
        _
      // Predicated region
      $region45: #{basic_res_block.3} parent=39 // pred_check
        %p515 = pneg %p112
      $region46: #{basic_res_block.3} parent=39 // pred_check_branch
        %517 = sbr.rel (%p515) target = $region48
      $region47: #{basic_res_block.3} parent=39 // pred_region
        %p518 = scmp.lt.s32.totalorder %s16, 1
        %s519 = scalar_select %p518, %s16, 1
        %s520 = smul.addr %s519, 2
        %s521 = scalar_lea.vmem %s3, %s520
      $region48: #{basic_res_block.3} parent=39 // pred_fallthru
        _
    $region40: #{basic_res_block.3} parent=5 // pred_fallthru
      _
  $region6: #{basic_res_block.3} parent=0 // loop_footer
    %s14 = sadd.s32 1, %s10
  $region7: #{basic_res_block.3} parent=0 // loop_footer_branch
    %9 = sbr.rel target = $region3
  $region8: #{basic_res_block.3} parent=0 // loop_exit
    _

// kernel: basic_res_block.5
$region0: #{basic_res_block.5}
  #allocation0 [shape = 'u32[]', space=smem, size = 0x4, offset = 0x4, fixed_abs, tag = 'smem constant byte address 0x4 - core index']
  #allocation1 [shape = 'u32[144,128]{1,0:T(1,128)}', space=vmem, size = 0x12000, scoped, tag = 'internal scratch']
  %s0 = inlined_call_operand.vmem [shape: f32[2,16,128], index: 0, kind: input, shape index: {}]
  %s1 = inlined_call_operand.vmem [shape: f32[2,16,128], index: 1, kind: input, shape index: {}]
  %s2 = inlined_call_operand.vmem [shape: f32[1,128], index: 2, kind: input, shape index: {}]
  %s3 = inlined_call_operand.vmem [shape: f32[1,128], index: 3, kind: input, shape index: {}]
  %s4 = inlined_call_operand.vmem [shape: f32[2,16,128], index: 4, kind: output, shape index: {}]
  %s5 = sld [smem:[#allocation0]]
  $region49: #{basic_res_block.5} parent=0
    _
  %s7 = ssub.s32 1, %s5
  %s8 = scalar_select 0, %s7, %s5
  loop: start=0, step=1, limit=4
  $region2: #{basic_res_block.5} parent=0 // loop_pre_header
    _
  $region3: #{basic_res_block.5} parent=0 // loop_header
    %s10 = sphi 0, %s14
    %p11 = scmp.ge.s32.totalorder %s10, 4
    %s20 = sphi 0, %s22
    %s23 = sphi 0, %s20
    %s24 = sphi 0, %s23
    %s40 = sphi 0, %s24
    %s46 = sphi 0, %s48
    %s49 = sphi 0, %s46
    %s50 = sphi 0, %s49
    %s66 = sphi 0, %s50
    %s70 = sphi 0, %s70
    %s72 = sphi 0, %s70
    %s73 = sphi 0, %s72
    %s87 = sphi 0, %s73
    %s91 = sphi 0, %s91
    %s93 = sphi 0, %s91
    %s94 = sphi 0, %s93
    %s108 = sphi 0, %s94
    %s114 = sphi 0, %s116
    %s117 = sphi 0, %s114
    %s118 = sphi 0, %s117
    %s134 = sphi 0, %s118
  $region4: #{basic_res_block.5} parent=0 // loop_header_branch
    %13 = sbr.rel (%p11) target = $region8
  $region5: #{basic_res_block.5} parent=0 // loop_body
    %s15 = ssub.s32 %s10, 1
    %s16 = ssub.s32 %s10, 2
    %s17 = sadd.s32 %s10, 1
    %s18 = ssub.s32 %s10, %s17
    %p19 = scmp.eq.s32.totalorder %s18, 0
    %s21 = sadd.s32 %s20, 1
    %s22 = scalar_select %p19, %s20, %s21
    %p25 = pneg %p19
    %p26 = scmp.eq.s32.totalorder %s10, 1
    %p27 = por %p25, %p26
    %p28 = scmp.ne.s32.totalorder %s20, %s23
    %p29 = scmp.eq.s32.totalorder %s10, 0
    %p30 = por %p28, %p29
    %p31 = scmp.ne.s32.totalorder %s20, %s23
    %p32 = scmp.eq.s32.totalorder %s15, 1
    %p33 = por %p31, %p32
    %p34 = scmp.ne.s32.totalorder %s23, %s24
    %p35 = scmp.eq.s32.totalorder %s15, 0
    %p36 = por %p34, %p35
    %p37 = scmp.ne.s32.totalorder %s23, %s24
    %p38 = scmp.eq.s32.totalorder %s16, 1
    %p39 = por %p37, %p38
    %p41 = scmp.ne.s32.totalorder %s24, %s40
    %p42 = scmp.eq.s32.totalorder %s16, 0
    %p43 = por %p41, %p42
    %s44 = ssub.s32 %s10, %s17
    %p45 = scmp.eq.s32.totalorder %s44, 0
    %s47 = sadd.s32 %s46, 1
    %s48 = scalar_select %p45, %s46, %s47
    %p51 = pneg %p45
    %p52 = scmp.eq.s32.totalorder %s10, 1
    %p53 = por %p51, %p52
    %p54 = scmp.ne.s32.totalorder %s46, %s49
    %p55 = scmp.eq.s32.totalorder %s10, 0
    %p56 = por %p54, %p55
    %p57 = scmp.ne.s32.totalorder %s46, %s49
    %p58 = scmp.eq.s32.totalorder %s15, 1
    %p59 = por %p57, %p58
    %p60 = scmp.ne.s32.totalorder %s49, %s50
    %p61 = scmp.eq.s32.totalorder %s15, 0
    %p62 = por %p60, %p61
    %p63 = scmp.ne.s32.totalorder %s49, %s50
    %p64 = scmp.eq.s32.totalorder %s16, 1
    %p65 = por %p63, %p64
    %p67 = scmp.ne.s32.totalorder %s50, %s66
    %p68 = scmp.eq.s32.totalorder %s16, 0
    %p69 = por %p67, %p68
    %s71 = sadd.s32 %s70, 1
    %p74 = scmp.eq.s32.totalorder %s10, 1
    %p75 = scmp.ne.s32.totalorder %s70, %s72
    %p76 = scmp.eq.s32.totalorder %s10, 0
    %p77 = por %p75, %p76
    %p78 = scmp.ne.s32.totalorder %s70, %s72
    %p79 = scmp.eq.s32.totalorder %s15, 1
    %p80 = por %p78, %p79
    %p81 = scmp.ne.s32.totalorder %s72, %s73
    %p82 = scmp.eq.s32.totalorder %s15, 0
    %p83 = por %p81, %p82
    %p84 = scmp.ne.s32.totalorder %s72, %s73
    %p85 = scmp.eq.s32.totalorder %s16, 1
    %p86 = por %p84, %p85
    %p88 = scmp.ne.s32.totalorder %s73, %s87
    %p89 = scmp.eq.s32.totalorder %s16, 0
    %p90 = por %p88, %p89
    %s92 = sadd.s32 %s91, 1
    %p95 = scmp.eq.s32.totalorder %s10, 1
    %p96 = scmp.ne.s32.totalorder %s91, %s93
    %p97 = scmp.eq.s32.totalorder %s10, 0
    %p98 = por %p96, %p97
    %p99 = scmp.ne.s32.totalorder %s91, %s93
    %p100 = scmp.eq.s32.totalorder %s15, 1
    %p101 = por %p99, %p100
    %p102 = scmp.ne.s32.totalorder %s93, %s94
    %p103 = scmp.eq.s32.totalorder %s15, 0
    %p104 = por %p102, %p103
    %p105 = scmp.ne.s32.totalorder %s93, %s94
    %p106 = scmp.eq.s32.totalorder %s16, 1
    %p107 = por %p105, %p106
    %p109 = scmp.ne.s32.totalorder %s94, %s108
    %p110 = scmp.eq.s32.totalorder %s16, 0
    %p111 = por %p109, %p110
    %s112 = ssub.s32 %s10, %s17
    %p113 = scmp.eq.s32.totalorder %s112, 0
    %s115 = sadd.s32 %s114, 1
    %s116 = scalar_select %p113, %s114, %s115
    %p119 = pneg %p113
    %p120 = scmp.eq.s32.totalorder %s10, 1
    %p121 = por %p119, %p120
    %p122 = scmp.ne.s32.totalorder %s114, %s117
    %p123 = scmp.eq.s32.totalorder %s10, 0
    %p124 = por %p122, %p123
    %p125 = scmp.ne.s32.totalorder %s114, %s117
    %p126 = scmp.eq.s32.totalorder %s15, 1
    %p127 = por %p125, %p126
    %p128 = scmp.ne.s32.totalorder %s117, %s118
    %p129 = scmp.eq.s32.totalorder %s15, 0
    %p130 = por %p128, %p129
    %p131 = scmp.ne.s32.totalorder %s117, %s118
    %p132 = scmp.eq.s32.totalorder %s16, 1
    %p133 = por %p131, %p132
    %p135 = scmp.ne.s32.totalorder %s118, %s134
    %p136 = scmp.eq.s32.totalorder %s16, 0
    %p137 = por %p135, %p136
    %p138 = scmp.le.s32.totalorder 1, %s10
    %p139 = scmp.lt.s32.totalorder %s10, 3
    %p140 = pnand %p138, %p139
    %p141 = pneg %p140
    // Predicated region
    $region9: #{basic_res_block.5} parent=5 // pred_check
      _
    $region10: #{basic_res_block.5} parent=5 // pred_check_branch
      %143 = sbr.rel (%p140) target = $region12
    $region11: #{basic_res_block.5} parent=5 // pred_region
      %s144 = ssub.s32 %s10, 1
      // Predicated region
      $region13: #{basic_res_block.5} parent=11 // pred_check
        %p145 = pneg %p83
      $region14: #{basic_res_block.5} parent=11 // pred_check_branch
        %147 = sbr.rel (%p145) target = $region16
      $region15: #{basic_res_block.5} parent=11 // pred_region
        _
      $region16: #{basic_res_block.5} parent=11 // pred_fallthru
        _
      // Predicated region
      $region17: #{basic_res_block.5} parent=11 // pred_check
        %p148 = pneg %p104
      $region18: #{basic_res_block.5} parent=11 // pred_check_branch
        %150 = sbr.rel (%p148) target = $region20
      $region19: #{basic_res_block.5} parent=11 // pred_region
        _
      $region20: #{basic_res_block.5} parent=11 // pred_fallthru
        _
    $region12: #{basic_res_block.5} parent=5 // pred_fallthru
      _
    %p151 = scmp.lt.s32.totalorder %s10, 2
    // Predicated region
    $region21: #{basic_res_block.5} parent=5 // pred_check
      %p152 = pneg %p151
    $region22: #{basic_res_block.5} parent=5 // pred_check_branch
      %154 = sbr.rel (%p152) target = $region24
    $region23: #{basic_res_block.5} parent=5 // pred_region
      // Predicated region
      $region25: #{basic_res_block.5} parent=23 // pred_check
        %p155 = pneg %p30
      $region26: #{basic_res_block.5} parent=23 // pred_check_branch
        %157 = sbr.rel (%p155) target = $region28
      $region27: #{basic_res_block.5} parent=23 // pred_region
        %p158 = scmp.lt.s32.totalorder %s10, 1
        %s159 = scalar_select %p158, %s10, 1
        %s160 = smul.addr %s159, 2
        %s161 = smul.addr %s160, 8
        %s162 = scalar_lea.vmem %s0, %s161
      $region28: #{basic_res_block.5} parent=23 // pred_fallthru
        _
      // Predicated region
      $region29: #{basic_res_block.5} parent=23 // pred_check
        %p163 = pneg %p56
      $region30: #{basic_res_block.5} parent=23 // pred_check_branch
        %165 = sbr.rel (%p163) target = $region32
      $region31: #{basic_res_block.5} parent=23 // pred_region
        %p166 = scmp.lt.s32.totalorder %s10, 1
        %s167 = scalar_select %p166, %s10, 1
        %s168 = smul.addr %s167, 2
        %s169 = smul.addr %s168, 8
        %s170 = scalar_lea.vmem %s1, %s169
      $region32: #{basic_res_block.5} parent=23 // pred_fallthru
        _
    $region24: #{basic_res_block.5} parent=5 // pred_fallthru
      _
    %p171 = scmp.le.s32.totalorder 1, %s10
    %p172 = scmp.lt.s32.totalorder %s10, 3
    %p173 = pnand %p171, %p172
    %p174 = pneg %p173
    // Predicated region
    $region33: #{basic_res_block.5} parent=5 // pred_check
      _
    $region34: #{basic_res_block.5} parent=5 // pred_check_branch
      %176 = sbr.rel (%p173) target = $region36
    $region35: #{basic_res_block.5} parent=5 // pred_region
      %s177 = ssub.s32 %s10, 1
      %p178 = scmp.lt.s32.totalorder %s15, 1
      %s179 = scalar_select %p178, %s15, 1
      %s180 = smul.addr %s179, 2
      %s181 = smul.addr %s180, 8
      %s182 = scalar_lea.vmem %s0, %s181
      %p183 = pneg %p36
      %p184 = pneg %p33
      %p185 = scmp.lt.s32.totalorder %s15, 1
      %s186 = scalar_select %p185, %s15, 1
      %s187 = smul.addr %s186, 2
      %s188 = smul.addr %s187, 8
      %s189 = scalar_lea.vmem %s1, %s188
      %p190 = pneg %p62
      %p191 = pneg %p59
      %p192 = pneg %p83
      %p193 = pneg %p80
      %p194 = pneg %p104
      %p195 = pneg %p101
      %p196 = pneg %p130
      %p197 = pneg %p127
      %p198 = scmp.lt.s32.totalorder %s15, 1
      %s199 = scalar_select %p198, %s15, 1
      %s200 = smul.addr %s199, 2
      %s201 = smul.addr %s200, 8
      %s202 = scalar_lea.vmem %s4, %s201
      %p203 = scmp.lt.s32.totalorder %s15, 1
      %s204 = scalar_select %p203, %s15, 1
      %s205 = smul.addr %s204, 2
      %s206 = smul.addr %s205, 8
      %s207 = scalar_lea.vmem %s0, %s206
      %p208 = scmp.lt.s32.totalorder %s15, 1
      %s209 = scalar_select %p208, %s15, 1
      %s210 = smul.addr %s209, 2
      %s211 = smul.addr %s210, 8
      %s212 = scalar_lea.vmem %s1, %s211
      %p213 = scmp.lt.s32.totalorder %s15, 1
      %s214 = scalar_select %p213, %s15, 1
      %s215 = smul.addr %s214, 2
      %s216 = smul.addr %s215, 8
      %s217 = scalar_lea.vmem %s4, %s216
      %v218 = vld [vmem:[%s207] sm:$0xff]
      %v219 = vld [vmem:[%s207 + $0x8] sm:$0xff]
      %v220 = vld [vmem:[%s2] sm:$0x1]
      %v222 = vlaneseq
      %v223 = vshrl.u32 %v222, 7
      %v224 = vsub.s32 0, %v223
      %v225 = vrot.slane %v220, %v224
      %v227 = vmul.f32 %v218, %v225
      %v228 = vmul.f32 %v219, %v225
      %v229 = vld [vmem:[%s3] sm:$0x1]
      %v231 = vlaneseq
      %v232 = vshrl.u32 %v231, 7
      %v233 = vsub.s32 0, %v232
      %v234 = vrot.slane %v229, %v233
      %v236 = vadd.f32 %v227, %v234
      %v237 = vadd.f32 %v228, %v234
      %v238 = vld [vmem:[%s212] sm:$0xff]
      %v239 = vld [vmem:[%s212 + $0x8] sm:$0xff]
      %v240 = vadd.f32 %v236, %v238
      %v241 = vadd.f32 %v237, %v239
      %v242 = vmax.f32 %v240, 0.0
      %v243 = vmax.f32 %v241, 0.0
      %244 = vst [vmem:[%s217] sm:$0xff] %v242
      %245 = vst [vmem:[%s217 + $0x8] sm:$0xff] %v243
      %p246 = scmp.lt.s32.totalorder %s15, 1
      %s247 = scalar_select %p246, %s15, 1
      %s248 = smul.addr %s247, 2
      %s249 = smul.addr %s248, 8
      %s250 = scalar_lea.vmem %s4, %s249
      // Predicated region
      $region37: #{basic_res_block.5} parent=35 // pred_check
        %p251 = pneg %p127
      $region38: #{basic_res_block.5} parent=35 // pred_check_branch
        %253 = sbr.rel (%p251) target = $region40
      $region39: #{basic_res_block.5} parent=35 // pred_region
        _
      $region40: #{basic_res_block.5} parent=35 // pred_fallthru
        _
    $region36: #{basic_res_block.5} parent=5 // pred_fallthru
      _
    %p254 = scmp.le.s32.totalorder 2, %s10
    // Predicated region
    $region41: #{basic_res_block.5} parent=5 // pred_check
      %p255 = pneg %p254
    $region42: #{basic_res_block.5} parent=5 // pred_check_branch
      %257 = sbr.rel (%p255) target = $region44
    $region43: #{basic_res_block.5} parent=5 // pred_region
      %s258 = ssub.s32 %s10, 2
      // Predicated region
      $region45: #{basic_res_block.5} parent=43 // pred_check
        %p259 = pneg %p133
      $region46: #{basic_res_block.5} parent=43 // pred_check_branch
        %261 = sbr.rel (%p259) target = $region48
      $region47: #{basic_res_block.5} parent=43 // pred_region
        %p262 = scmp.lt.s32.totalorder %s16, 1
        %s263 = scalar_select %p262, %s16, 1
        %s264 = smul.addr %s263, 2
        %s265 = smul.addr %s264, 8
        %s266 = scalar_lea.vmem %s4, %s265
      $region48: #{basic_res_block.5} parent=43 // pred_fallthru
        _
    $region44: #{basic_res_block.5} parent=5 // pred_fallthru
      _
  $region6: #{basic_res_block.5} parent=0 // loop_footer
    %s14 = sadd.s32 1, %s10
  $region7: #{basic_res_block.5} parent=0 // loop_footer_branch
    %9 = sbr.rel target = $region3
  $region8: #{basic_res_block.5} parent=0 // loop_exit
    _

// kernel: basic_res_block.4
$region0: #{basic_res_block.4}
  #allocation0 [shape = 'u32[]', space=smem, size = 0x4, offset = 0x4, fixed_abs, tag = 'smem constant byte address 0x4 - core index']
  #allocation1 [shape = 'u32[144,128]{1,0:T(1,128)}', space=vmem, size = 0x12000, scoped, tag = 'internal scratch']
  #allocation2 [shape = 'f32[18,128]{1,0:T(8,128)}', space=vmem, size = 0x3000, scoped, tag = 'scratch operand']
  %s0 = inlined_call_operand.vmem [shape: f32[2,16,128], index: 0, kind: input, shape index: {}]
  %s1 = inlined_call_operand.vmem [shape: f32[1,128], index: 1, kind: input, shape index: {}]
  %s2 = inlined_call_operand.vmem [shape: f32[1,128], index: 2, kind: input, shape index: {}]
  %s3 = inlined_call_operand.vmem [shape: f32[3,128,128], index: 3, kind: input, shape index: {}]
  %s4 = inlined_call_operand.vmem [shape: f32[2,16,128], index: 4, kind: output, shape index: {0}]
  %s5 = inlined_call_operand.vmem [shape: f32[2,2,128], index: 5, kind: output, shape index: {1}]
  %6 = xla_tuple %s4, %s5
  %s7 = sld [smem:[#allocation0]]
  $region57: #{basic_res_block.4} parent=0
    _
  %s9 = ssub.s32 1, %s7
  %s10 = scalar_select 0, %s9, %s7
  loop: start=0, step=1, limit=4
  $region2: #{basic_res_block.4} parent=0 // loop_pre_header
    _
  $region3: #{basic_res_block.4} parent=0 // loop_header
    %s12 = sphi 0, %s16
    %p13 = scmp.ge.s32.totalorder %s12, 4
    %s22 = sphi 0, %s24
    %s25 = sphi 0, %s22
    %s26 = sphi 0, %s25
    %s42 = sphi 0, %s26
    %s46 = sphi 0, %s46
    %s48 = sphi 0, %s46
    %s49 = sphi 0, %s48
    %s63 = sphi 0, %s49
    %s67 = sphi 0, %s67
    %s69 = sphi 0, %s67
    %s70 = sphi 0, %s69
    %s84 = sphi 0, %s70
    %s88 = sphi 0, %s88
    %s90 = sphi 0, %s88
    %s91 = sphi 0, %s90
    %s105 = sphi 0, %s91
    %s111 = sphi 0, %s113
    %s114 = sphi 0, %s111
    %s115 = sphi 0, %s114
    %s131 = sphi 0, %s115
    %s137 = sphi 0, %s139
    %s140 = sphi 0, %s137
    %s141 = sphi 0, %s140
    %s157 = sphi 0, %s141
  $region4: #{basic_res_block.4} parent=0 // loop_header_branch
    %15 = sbr.rel (%p13) target = $region8
  $region5: #{basic_res_block.4} parent=0 // loop_body
    %s17 = ssub.s32 %s12, 1
    %s18 = ssub.s32 %s12, 2
    %s19 = sadd.s32 %s12, 1
    %s20 = ssub.s32 %s12, %s19
    %p21 = scmp.eq.s32.totalorder %s20, 0
    %s23 = sadd.s32 %s22, 1
    %s24 = scalar_select %p21, %s22, %s23
    %p27 = pneg %p21
    %p28 = scmp.eq.s32.totalorder %s12, 1
    %p29 = por %p27, %p28
    %p30 = scmp.ne.s32.totalorder %s22, %s25
    %p31 = scmp.eq.s32.totalorder %s12, 0
    %p32 = por %p30, %p31
    %p33 = scmp.ne.s32.totalorder %s22, %s25
    %p34 = scmp.eq.s32.totalorder %s17, 1
    %p35 = por %p33, %p34
    %p36 = scmp.ne.s32.totalorder %s25, %s26
    %p37 = scmp.eq.s32.totalorder %s17, 0
    %p38 = por %p36, %p37
    %p39 = scmp.ne.s32.totalorder %s25, %s26
    %p40 = scmp.eq.s32.totalorder %s18, 1
    %p41 = por %p39, %p40
    %p43 = scmp.ne.s32.totalorder %s26, %s42
    %p44 = scmp.eq.s32.totalorder %s18, 0
    %p45 = por %p43, %p44
    %s47 = sadd.s32 %s46, 1
    %p50 = scmp.eq.s32.totalorder %s12, 1
    %p51 = scmp.ne.s32.totalorder %s46, %s48
    %p52 = scmp.eq.s32.totalorder %s12, 0
    %p53 = por %p51, %p52
    %p54 = scmp.ne.s32.totalorder %s46, %s48
    %p55 = scmp.eq.s32.totalorder %s17, 1
    %p56 = por %p54, %p55
    %p57 = scmp.ne.s32.totalorder %s48, %s49
    %p58 = scmp.eq.s32.totalorder %s17, 0
    %p59 = por %p57, %p58
    %p60 = scmp.ne.s32.totalorder %s48, %s49
    %p61 = scmp.eq.s32.totalorder %s18, 1
    %p62 = por %p60, %p61
    %p64 = scmp.ne.s32.totalorder %s49, %s63
    %p65 = scmp.eq.s32.totalorder %s18, 0
    %p66 = por %p64, %p65
    %s68 = sadd.s32 %s67, 1
    %p71 = scmp.eq.s32.totalorder %s12, 1
    %p72 = scmp.ne.s32.totalorder %s67, %s69
    %p73 = scmp.eq.s32.totalorder %s12, 0
    %p74 = por %p72, %p73
    %p75 = scmp.ne.s32.totalorder %s67, %s69
    %p76 = scmp.eq.s32.totalorder %s17, 1
    %p77 = por %p75, %p76
    %p78 = scmp.ne.s32.totalorder %s69, %s70
    %p79 = scmp.eq.s32.totalorder %s17, 0
    %p80 = por %p78, %p79
    %p81 = scmp.ne.s32.totalorder %s69, %s70
    %p82 = scmp.eq.s32.totalorder %s18, 1
    %p83 = por %p81, %p82
    %p85 = scmp.ne.s32.totalorder %s70, %s84
    %p86 = scmp.eq.s32.totalorder %s18, 0
    %p87 = por %p85, %p86
    %s89 = sadd.s32 %s88, 1
    %p92 = scmp.eq.s32.totalorder %s12, 1
    %p93 = scmp.ne.s32.totalorder %s88, %s90
    %p94 = scmp.eq.s32.totalorder %s12, 0
    %p95 = por %p93, %p94
    %p96 = scmp.ne.s32.totalorder %s88, %s90
    %p97 = scmp.eq.s32.totalorder %s17, 1
    %p98 = por %p96, %p97
    %p99 = scmp.ne.s32.totalorder %s90, %s91
    %p100 = scmp.eq.s32.totalorder %s17, 0
    %p101 = por %p99, %p100
    %p102 = scmp.ne.s32.totalorder %s90, %s91
    %p103 = scmp.eq.s32.totalorder %s18, 1
    %p104 = por %p102, %p103
    %p106 = scmp.ne.s32.totalorder %s91, %s105
    %p107 = scmp.eq.s32.totalorder %s18, 0
    %p108 = por %p106, %p107
    %s109 = ssub.s32 %s12, %s19
    %p110 = scmp.eq.s32.totalorder %s109, 0
    %s112 = sadd.s32 %s111, 1
    %s113 = scalar_select %p110, %s111, %s112
    %p116 = pneg %p110
    %p117 = scmp.eq.s32.totalorder %s12, 1
    %p118 = por %p116, %p117
    %p119 = scmp.ne.s32.totalorder %s111, %s114
    %p120 = scmp.eq.s32.totalorder %s12, 0
    %p121 = por %p119, %p120
    %p122 = scmp.ne.s32.totalorder %s111, %s114
    %p123 = scmp.eq.s32.totalorder %s17, 1
    %p124 = por %p122, %p123
    %p125 = scmp.ne.s32.totalorder %s114, %s115
    %p126 = scmp.eq.s32.totalorder %s17, 0
    %p127 = por %p125, %p126
    %p128 = scmp.ne.s32.totalorder %s114, %s115
    %p129 = scmp.eq.s32.totalorder %s18, 1
    %p130 = por %p128, %p129
    %p132 = scmp.ne.s32.totalorder %s115, %s131
    %p133 = scmp.eq.s32.totalorder %s18, 0
    %p134 = por %p132, %p133
    %s135 = ssub.s32 %s12, %s19
    %p136 = scmp.eq.s32.totalorder %s135, 0
    %s138 = sadd.s32 %s137, 1
    %s139 = scalar_select %p136, %s137, %s138
    %p142 = pneg %p136
    %p143 = scmp.eq.s32.totalorder %s12, 1
    %p144 = por %p142, %p143
    %p145 = scmp.ne.s32.totalorder %s137, %s140
    %p146 = scmp.eq.s32.totalorder %s12, 0
    %p147 = por %p145, %p146
    %p148 = scmp.ne.s32.totalorder %s137, %s140
    %p149 = scmp.eq.s32.totalorder %s17, 1
    %p150 = por %p148, %p149
    %p151 = scmp.ne.s32.totalorder %s140, %s141
    %p152 = scmp.eq.s32.totalorder %s17, 0
    %p153 = por %p151, %p152
    %p154 = scmp.ne.s32.totalorder %s140, %s141
    %p155 = scmp.eq.s32.totalorder %s18, 1
    %p156 = por %p154, %p155
    %p158 = scmp.ne.s32.totalorder %s141, %s157
    %p159 = scmp.eq.s32.totalorder %s18, 0
    %p160 = por %p158, %p159
    %p161 = scmp.le.s32.totalorder 1, %s12
    %p162 = scmp.lt.s32.totalorder %s12, 3
    %p163 = pnand %p161, %p162
    %p164 = pneg %p163
    // Predicated region
    $region9: #{basic_res_block.4} parent=5 // pred_check
      _
    $region10: #{basic_res_block.4} parent=5 // pred_check_branch
      %166 = sbr.rel (%p163) target = $region12
    $region11: #{basic_res_block.4} parent=5 // pred_region
      %s167 = ssub.s32 %s12, 1
      // Predicated region
      $region13: #{basic_res_block.4} parent=11 // pred_check
        %p168 = pneg %p59
      $region14: #{basic_res_block.4} parent=11 // pred_check_branch
        %170 = sbr.rel (%p168) target = $region16
      $region15: #{basic_res_block.4} parent=11 // pred_region
        _
      $region16: #{basic_res_block.4} parent=11 // pred_fallthru
        _
      // Predicated region
      $region17: #{basic_res_block.4} parent=11 // pred_check
        %p171 = pneg %p80
      $region18: #{basic_res_block.4} parent=11 // pred_check_branch
        %173 = sbr.rel (%p171) target = $region20
      $region19: #{basic_res_block.4} parent=11 // pred_region
        _
      $region20: #{basic_res_block.4} parent=11 // pred_fallthru
        _
      // Predicated region
      $region21: #{basic_res_block.4} parent=11 // pred_check
        %p174 = pneg %p101
      $region22: #{basic_res_block.4} parent=11 // pred_check_branch
        %176 = sbr.rel (%p174) target = $region24
      $region23: #{basic_res_block.4} parent=11 // pred_region
        _
      $region24: #{basic_res_block.4} parent=11 // pred_fallthru
        _
    $region12: #{basic_res_block.4} parent=5 // pred_fallthru
      _
    %p177 = scmp.lt.s32.totalorder %s12, 2
    // Predicated region
    $region25: #{basic_res_block.4} parent=5 // pred_check
      %p178 = pneg %p177
    $region26: #{basic_res_block.4} parent=5 // pred_check_branch
      %180 = sbr.rel (%p178) target = $region28
    $region27: #{basic_res_block.4} parent=5 // pred_region
      // Predicated region
      $region29: #{basic_res_block.4} parent=27 // pred_check
        %p181 = pneg %p32
      $region30: #{basic_res_block.4} parent=27 // pred_check_branch
        %183 = sbr.rel (%p181) target = $region32
      $region31: #{basic_res_block.4} parent=27 // pred_region
        %p184 = scmp.lt.s32.totalorder %s12, 1
        %s185 = scalar_select %p184, %s12, 1
        %s186 = smul.addr %s185, 2
        %s187 = smul.addr %s186, 8
        %s188 = scalar_lea.vmem %s0, %s187
      $region32: #{basic_res_block.4} parent=27 // pred_fallthru
        _
    $region28: #{basic_res_block.4} parent=5 // pred_fallthru
      _
    %p189 = scmp.le.s32.totalorder 1, %s12
    %p190 = scmp.lt.s32.totalorder %s12, 3
    %p191 = pnand %p189, %p190
    %p192 = pneg %p191
    // Predicated region
    $region33: #{basic_res_block.4} parent=5 // pred_check
      _
    $region34: #{basic_res_block.4} parent=5 // pred_check_branch
      %194 = sbr.rel (%p191) target = $region36
    $region35: #{basic_res_block.4} parent=5 // pred_region
      %s195 = ssub.s32 %s12, 1
      %p196 = scmp.lt.s32.totalorder %s17, 1
      %s197 = scalar_select %p196, %s17, 1
      %s198 = smul.addr %s197, 2
      %s199 = smul.addr %s198, 8
      %s200 = scalar_lea.vmem %s0, %s199
      %p201 = pneg %p38
      %p202 = pneg %p35
      %p203 = pneg %p59
      %p204 = pneg %p56
      %p205 = pneg %p80
      %p206 = pneg %p77
      %p207 = pneg %p101
      %p208 = pneg %p98
      %p209 = pneg %p127
      %p210 = pneg %p124
      %p211 = scmp.lt.s32.totalorder %s17, 1
      %s212 = scalar_select %p211, %s17, 1
      %s213 = smul.addr %s212, 2
      %s214 = smul.addr %s213, 8
      %s215 = scalar_lea.vmem %s4, %s214
      %p216 = pneg %p153
      %p217 = pneg %p150
      %p218 = scmp.lt.s32.totalorder %s17, 1
      %s219 = scalar_select %p218, %s17, 1
      %s220 = smul.addr %s219, 2
      %s221 = scalar_lea.vmem %s5, %s220
      %p222 = scmp.lt.s32.totalorder %s17, 1
      %s223 = scalar_select %p222, %s17, 1
      %s224 = smul.addr %s223, 2
      %s225 = smul.addr %s224, 8
      %s226 = scalar_lea.vmem %s0, %s225
      %p227 = scmp.lt.s32.totalorder %s17, 1
      %s228 = scalar_select %p227, %s17, 1
      %s229 = smul.addr %s228, 2
      %s230 = smul.addr %s229, 8
      %s231 = scalar_lea.vmem %s4, %s230
      %p232 = scmp.lt.s32.totalorder %s17, 1
      %s233 = scalar_select %p232, %s17, 1
      %s234 = smul.addr %s233, 2
      %s235 = scalar_lea.vmem %s5, %s234
      %v236 = vld [vmem:[%s226] sm:$0xff]
      %v237 = vld [vmem:[%s226 + $0x8] sm:$0xff]
      %v238 = vld [vmem:[%s1] sm:$0x1]
      %v240 = vlaneseq
      %v241 = vshrl.u32 %v240, 7
      %v242 = vsub.s32 0, %v241
      %v243 = vrot.slane %v238, %v242
      %v245 = vmul.f32 %v236, %v243
      %v246 = vmul.f32 %v237, %v243
      %v247 = vld [vmem:[%s2] sm:$0x1]
      %v249 = vlaneseq
      %v250 = vshrl.u32 %v249, 7
      %v251 = vsub.s32 0, %v250
      %v252 = vrot.slane %v247, %v251
      %v254 = vadd.f32 %v245, %v252
      %v255 = vadd.f32 %v246, %v252
      %v256 = vmax.f32 %v254, 0.0
      %v257 = vmax.f32 %v255, 0.0
      %258 = vst [vmem:[#allocation2] sm:$0x1] 0.0
      %259 = vst [vmem:[#allocation2 + $0x11] sm:$0x1] 0.0
      %260 = vst [vmem:[#allocation2 + $0x1] sm:$0xff] %v256
      %261 = vst [vmem:[#allocation2 + $0x9] sm:$0xff] %v257
      %v262 = vld [vmem:[#allocation2] sm:$0xff]
      %v263 = vld [vmem:[#allocation2 + $0x8] sm:$0xff]
      %v264 = vld [vmem:[%s3] sm:$0xff]
      %v265 = vld [vmem:[%s3 + $0x8] sm:$0xff]
      %v266 = vld [vmem:[%s3 + $0x10] sm:$0xff]
      %v267 = vld [vmem:[%s3 + $0x18] sm:$0xff]
      %v268 = vld [vmem:[%s3 + $0x20] sm:$0xff]
      %v269 = vld [vmem:[%s3 + $0x28] sm:$0xff]
      %v270 = vld [vmem:[%s3 + $0x30] sm:$0xff]
      %v271 = vld [vmem:[%s3 + $0x38] sm:$0xff]
      %v272 = vld [vmem:[%s3 + $0x40] sm:$0xff]
      %v273 = vld [vmem:[%s3 + $0x48] sm:$0xff]
      %v274 = vld [vmem:[%s3 + $0x50] sm:$0xff]
      %v275 = vld [vmem:[%s3 + $0x58] sm:$0xff]
      %v276 = vld [vmem:[%s3 + $0x60] sm:$0xff]
      %v277 = vld [vmem:[%s3 + $0x68] sm:$0xff]
      %v278 = vld [vmem:[%s3 + $0x70] sm:$0xff]
      %v279 = vld [vmem:[%s3 + $0x78] sm:$0xff]
      %v280 = vld [vmem:[#allocation2 + $0x1] sm:$0xff]
      %v281 = vld [vmem:[#allocation2 + $0x9] sm:$0xff]
      %s282 = scalar_lea.vmem %s3, 128
      %v283 = vld [vmem:[%s282] sm:$0xff]
      %v284 = vld [vmem:[%s282 + $0x8] sm:$0xff]
      %v285 = vld [vmem:[%s282 + $0x10] sm:$0xff]
      %v286 = vld [vmem:[%s282 + $0x18] sm:$0xff]
      %v287 = vld [vmem:[%s282 + $0x20] sm:$0xff]
      %v288 = vld [vmem:[%s282 + $0x28] sm:$0xff]
      %v289 = vld [vmem:[%s282 + $0x30] sm:$0xff]
      %v290 = vld [vmem:[%s282 + $0x38] sm:$0xff]
      %v291 = vld [vmem:[%s282 + $0x40] sm:$0xff]
      %v292 = vld [vmem:[%s282 + $0x48] sm:$0xff]
      %v293 = vld [vmem:[%s282 + $0x50] sm:$0xff]
      %v294 = vld [vmem:[%s282 + $0x58] sm:$0xff]
      %v295 = vld [vmem:[%s282 + $0x60] sm:$0xff]
      %v296 = vld [vmem:[%s282 + $0x68] sm:$0xff]
      %v297 = vld [vmem:[%s282 + $0x70] sm:$0xff]
      %v298 = vld [vmem:[%s282 + $0x78] sm:$0xff]
      %299 = vmatprep.subr.mxu0 0.0
      %300 = vmatpush1.msra.mxu0 %v298
      %301 = vmatprep.subr.mxu0 0.0
      %302 = vmatpush1.msra.mxu0 %v297
      %303 = vmatprep.subr.mxu0 0.0
      %304 = vmatpush1.msra.mxu0 %v296
      %305 = vmatprep.subr.mxu0 0.0
      %306 = vmatpush1.msra.mxu0 %v295
      %307 = vmatprep.subr.mxu0 0.0
      %308 = vmatpush1.msra.mxu0 %v294
      %309 = vmatprep.subr.mxu0 0.0
      %310 = vmatpush1.msra.mxu0 %v293
      %311 = vmatprep.subr.mxu0 0.0
      %312 = vmatpush1.msra.mxu0 %v292
      %313 = vmatprep.subr.mxu0 0.0
      %314 = vmatpush1.msra.mxu0 %v291
      %315 = vmatprep.subr.mxu0 0.0
      %316 = vmatpush1.msra.mxu0 %v290
      %317 = vmatprep.subr.mxu0 0.0
      %318 = vmatpush1.msra.mxu0 %v289
      %319 = vmatprep.subr.mxu0 0.0
      %320 = vmatpush1.msra.mxu0 %v288
      %321 = vmatprep.subr.mxu0 0.0
      %322 = vmatpush1.msra.mxu0 %v287
      %323 = vmatprep.subr.mxu0 0.0
      %324 = vmatpush1.msra.mxu0 %v286
      %325 = vmatprep.subr.mxu0 0.0
      %326 = vmatpush1.msra.mxu0 %v285
      %327 = vmatprep.subr.mxu0 0.0
      %328 = vmatpush1.msra.mxu0 %v284
      %329 = vmatprep.subr.mxu0 0.0
      %330 = vmatpush1.msra.mxu0 %v283
      %331 = vmatprep.subr.mxu0 0.0
      %332 = vmatpush2.msra.mxu0 0.0
      %333 = vmatprep.subr.mxu0 0.0
      %334 = vmatpush2.msra.mxu0 0.0
      %335 = vmatprep.subr.mxu0 0.0
      %336 = vmatpush2.msra.mxu0 0.0
      %337 = vmatprep.subr.mxu0 0.0
      %338 = vmatpush2.msra.mxu0 0.0
      %339 = vmatprep.subr.mxu0 0.0
      %340 = vmatpush2.msra.mxu0 0.0
      %341 = vmatprep.subr.mxu0 0.0
      %342 = vmatpush2.msra.mxu0 0.0
      %343 = vmatprep.subr.mxu0 0.0
      %344 = vmatpush2.msra.mxu0 0.0
      %345 = vmatprep.subr.mxu0 0.0
      %346 = vmatpush2.msra.mxu0 0.0
      %347 = vmatprep.subr.mxu0 0.0
      %348 = vmatpush2.msra.mxu0 0.0
      %349 = vmatprep.subr.mxu0 0.0
      %350 = vmatpush2.msra.mxu0 0.0
      %351 = vmatprep.subr.mxu0 0.0
      %352 = vmatpush2.msra.mxu0 0.0
      %353 = vmatprep.subr.mxu0 0.0
      %354 = vmatpush2.msra.mxu0 0.0
      %355 = vmatprep.subr.mxu0 0.0
      %356 = vmatpush2.msra.mxu0 0.0
      %357 = vmatprep.subr.mxu0 0.0
      %358 = vmatpush2.msra.mxu0 0.0
      %359 = vmatprep.subr.mxu0 0.0
      %360 = vmatpush2.msra.mxu0 0.0
      %361 = vmatprep.subr.mxu0 0.0
      %362 = vmatpush2.msra.mxu0 0.0
      %363 = vmatprep.mubr.f32.mxu0 0.0
      %364 = vmatmul.mubr.f32.gmra.mxu0 %v280
      %v365 = vpop.f32.mrf.mxu0
      %v366 = vadd.f32 0.0, %v365
      %v367 = vpop.f32.mrf.mxu0
      %368 = vmatprep.mubr.f32.mxu0 0.0
      %369 = vmatmul.mubr.f32.gmra.mxu0 %v281
      %v370 = vpop.f32.mrf.mxu0
      %v371 = vadd.f32 0.0, %v370
      %v372 = vpop.f32.mrf.mxu0
      %373 = vdwg.mxu0
      %374 = vmatprep.subr.mxu0 0.0
      %375 = vmatpush1.msra.mxu0 %v279
      %376 = vmatprep.subr.mxu0 0.0
      %377 = vmatpush1.msra.mxu0 %v278
      %378 = vmatprep.subr.mxu0 0.0
      %379 = vmatpush1.msra.mxu0 %v277
      %380 = vmatprep.subr.mxu0 0.0
      %381 = vmatpush1.msra.mxu0 %v276
      %382 = vmatprep.subr.mxu0 0.0
      %383 = vmatpush1.msra.mxu0 %v275
      %384 = vmatprep.subr.mxu0 0.0
      %385 = vmatpush1.msra.mxu0 %v274
      %386 = vmatprep.subr.mxu0 0.0
      %387 = vmatpush1.msra.mxu0 %v273
      %388 = vmatprep.subr.mxu0 0.0
      %389 = vmatpush1.msra.mxu0 %v272
      %390 = vmatprep.subr.mxu0 0.0
      %391 = vmatpush1.msra.mxu0 %v271
      %392 = vmatprep.subr.mxu0 0.0
      %393 = vmatpush1.msra.mxu0 %v270
      %394 = vmatprep.subr.mxu0 0.0
      %395 = vmatpush1.msra.mxu0 %v269
      %396 = vmatprep.subr.mxu0 0.0
      %397 = vmatpush1.msra.mxu0 %v268
      %398 = vmatprep.subr.mxu0 0.0
      %399 = vmatpush1.msra.mxu0 %v267
      %400 = vmatprep.subr.mxu0 0.0
      %401 = vmatpush1.msra.mxu0 %v266
      %402 = vmatprep.subr.mxu0 0.0
      %403 = vmatpush1.msra.mxu0 %v265
      %404 = vmatprep.subr.mxu0 0.0
      %405 = vmatpush1.msra.mxu0 %v264
      %406 = vmatprep.subr.mxu0 0.0
      %407 = vmatpush2.msra.mxu0 0.0
      %408 = vmatprep.subr.mxu0 0.0
      %409 = vmatpush2.msra.mxu0 0.0
      %410 = vmatprep.subr.mxu0 0.0
      %411 = vmatpush2.msra.mxu0 0.0
      %412 = vmatprep.subr.mxu0 0.0
      %413 = vmatpush2.msra.mxu0 0.0
      %414 = vmatprep.subr.mxu0 0.0
      %415 = vmatpush2.msra.mxu0 0.0
      %416 = vmatprep.subr.mxu0 0.0
      %417 = vmatpush2.msra.mxu0 0.0
      %418 = vmatprep.subr.mxu0 0.0
      %419 = vmatpush2.msra.mxu0 0.0
      %420 = vmatprep.subr.mxu0 0.0
      %421 = vmatpush2.msra.mxu0 0.0
      %422 = vmatprep.subr.mxu0 0.0
      %423 = vmatpush2.msra.mxu0 0.0
      %424 = vmatprep.subr.mxu0 0.0
      %425 = vmatpush2.msra.mxu0 0.0
      %426 = vmatprep.subr.mxu0 0.0
      %427 = vmatpush2.msra.mxu0 0.0
      %428 = vmatprep.subr.mxu0 0.0
      %429 = vmatpush2.msra.mxu0 0.0
      %430 = vmatprep.subr.mxu0 0.0
      %431 = vmatpush2.msra.mxu0 0.0
      %432 = vmatprep.subr.mxu0 0.0
      %433 = vmatpush2.msra.mxu0 0.0
      %434 = vmatprep.subr.mxu0 0.0
      %435 = vmatpush2.msra.mxu0 0.0
      %436 = vmatprep.subr.mxu0 0.0
      %437 = vmatpush2.msra.mxu0 0.0
      %438 = vmatprep.mubr.f32.mxu0 0.0
      %439 = vmatmul.mubr.f32.gmra.mxu0 %v262
      %v440 = vpop.f32.mrf.mxu0
      %v441 = vadd.f32 %v366, %v440
      %v442 = vpop.f32.mrf.mxu0
      %443 = vmatprep.mubr.f32.mxu0 0.0
      %444 = vmatmul.mubr.f32.gmra.mxu0 %v263
      %v445 = vpop.f32.mrf.mxu0
      %v446 = vadd.f32 %v371, %v445
      %v447 = vpop.f32.mrf.mxu0
      %448 = vdwg.mxu0
      %v449 = vld [vmem:[#allocation2 + $0x2] sm:$0xff]
      %v450 = vld [vmem:[#allocation2 + $0xa] sm:$0xff]
      %s451 = scalar_lea.vmem %s3, 256
      %v452 = vld [vmem:[%s451] sm:$0xff]
      %v453 = vld [vmem:[%s451 + $0x8] sm:$0xff]
      %v454 = vld [vmem:[%s451 + $0x10] sm:$0xff]
      %v455 = vld [vmem:[%s451 + $0x18] sm:$0xff]
      %v456 = vld [vmem:[%s451 + $0x20] sm:$0xff]
      %v457 = vld [vmem:[%s451 + $0x28] sm:$0xff]
      %v458 = vld [vmem:[%s451 + $0x30] sm:$0xff]
      %v459 = vld [vmem:[%s451 + $0x38] sm:$0xff]
      %v460 = vld [vmem:[%s451 + $0x40] sm:$0xff]
      %v461 = vld [vmem:[%s451 + $0x48] sm:$0xff]
      %v462 = vld [vmem:[%s451 + $0x50] sm:$0xff]
      %v463 = vld [vmem:[%s451 + $0x58] sm:$0xff]
      %v464 = vld [vmem:[%s451 + $0x60] sm:$0xff]
      %v465 = vld [vmem:[%s451 + $0x68] sm:$0xff]
      %v466 = vld [vmem:[%s451 + $0x70] sm:$0xff]
      %v467 = vld [vmem:[%s451 + $0x78] sm:$0xff]
      %468 = vmatprep.subr.mxu0 0.0
      %469 = vmatpush1.msra.mxu0 %v467
      %470 = vmatprep.subr.mxu0 0.0
      %471 = vmatpush1.msra.mxu0 %v466
      %472 = vmatprep.subr.mxu0 0.0
      %473 = vmatpush1.msra.mxu0 %v465
      %474 = vmatprep.subr.mxu0 0.0
      %475 = vmatpush1.msra.mxu0 %v464
      %476 = vmatprep.subr.mxu0 0.0
      %477 = vmatpush1.msra.mxu0 %v463
      %478 = vmatprep.subr.mxu0 0.0
      %479 = vmatpush1.msra.mxu0 %v462
      %480 = vmatprep.subr.mxu0 0.0
      %481 = vmatpush1.msra.mxu0 %v461
      %482 = vmatprep.subr.mxu0 0.0
      %483 = vmatpush1.msra.mxu0 %v460
      %484 = vmatprep.subr.mxu0 0.0
      %485 = vmatpush1.msra.mxu0 %v459
      %486 = vmatprep.subr.mxu0 0.0
      %487 = vmatpush1.msra.mxu0 %v458
      %488 = vmatprep.subr.mxu0 0.0
      %489 = vmatpush1.msra.mxu0 %v457
      %490 = vmatprep.subr.mxu0 0.0
      %491 = vmatpush1.msra.mxu0 %v456
      %492 = vmatprep.subr.mxu0 0.0
      %493 = vmatpush1.msra.mxu0 %v455
      %494 = vmatprep.subr.mxu0 0.0
      %495 = vmatpush1.msra.mxu0 %v454
      %496 = vmatprep.subr.mxu0 0.0
      %497 = vmatpush1.msra.mxu0 %v453
      %498 = vmatprep.subr.mxu0 0.0
      %499 = vmatpush1.msra.mxu0 %v452
      %500 = vmatprep.subr.mxu0 0.0
      %501 = vmatpush2.msra.mxu0 0.0
      %502 = vmatprep.subr.mxu0 0.0
      %503 = vmatpush2.msra.mxu0 0.0
      %504 = vmatprep.subr.mxu0 0.0
      %505 = vmatpush2.msra.mxu0 0.0
      %506 = vmatprep.subr.mxu0 0.0
      %507 = vmatpush2.msra.mxu0 0.0
      %508 = vmatprep.subr.mxu0 0.0
      %509 = vmatpush2.msra.mxu0 0.0
      %510 = vmatprep.subr.mxu0 0.0
      %511 = vmatpush2.msra.mxu0 0.0
      %512 = vmatprep.subr.mxu0 0.0
      %513 = vmatpush2.msra.mxu0 0.0
      %514 = vmatprep.subr.mxu0 0.0
      %515 = vmatpush2.msra.mxu0 0.0
      %516 = vmatprep.subr.mxu0 0.0
      %517 = vmatpush2.msra.mxu0 0.0
      %518 = vmatprep.subr.mxu0 0.0
      %519 = vmatpush2.msra.mxu0 0.0
      %520 = vmatprep.subr.mxu0 0.0
      %521 = vmatpush2.msra.mxu0 0.0
      %522 = vmatprep.subr.mxu0 0.0
      %523 = vmatpush2.msra.mxu0 0.0
      %524 = vmatprep.subr.mxu0 0.0
      %525 = vmatpush2.msra.mxu0 0.0
      %526 = vmatprep.subr.mxu0 0.0
      %527 = vmatpush2.msra.mxu0 0.0
      %528 = vmatprep.subr.mxu0 0.0
      %529 = vmatpush2.msra.mxu0 0.0
      %530 = vmatprep.subr.mxu0 0.0
      %531 = vmatpush2.msra.mxu0 0.0
      %532 = vmatprep.mubr.f32.mxu0 0.0
      %533 = vmatmul.mubr.f32.gmra.mxu0 %v449
      %v534 = vpop.f32.mrf.mxu0
      %v535 = vadd.f32 0.0, %v534
      %v536 = vpop.f32.mrf.mxu0
      %537 = vmatprep.mubr.f32.mxu0 0.0
      %538 = vmatmul.mubr.f32.gmra.mxu0 %v450
      %v539 = vpop.f32.mrf.mxu0
      %v540 = vadd.f32 0.0, %v539
      %v541 = vpop.f32.mrf.mxu0
      %542 = vdwg.mxu0
      %v543 = vadd.f32 %v441, %v535
      %v544 = vadd.f32 %v446, %v540
      %545 = vst [vmem:[%s231] sm:$0xff] %v543
      %546 = vst [vmem:[%s231 + $0x8] sm:$0xff] %v544
      %v547 = vadd.f32 %v543, %v544
      %v548 = vrot.slane %v547, 4
      %v549 = vadd.f32 %v547, %v548
      %v550 = vrot.slane %v549, 2
      %v551 = vadd.f32 %v549, %v550
      %v552 = vrot.slane %v551, 1
      %v553 = vadd.f32 %v551, %v552
      %554 = vst [vmem:[%s235] sm:$0x1] %v553
      %v555 = vmul.f32 %v543, %v543
      %v556 = vmul.f32 %v544, %v544
      %v557 = vadd.f32 %v555, %v556
      %v558 = vrot.slane %v557, 4
      %v559 = vadd.f32 %v557, %v558
      %v560 = vrot.slane %v559, 2
      %v561 = vadd.f32 %v559, %v560
      %v562 = vrot.slane %v561, 1
      %v563 = vadd.f32 %v561, %v562
      %564 = vst [vmem:[%s235 + $0x1] sm:$0x1] %v563
      %p565 = scmp.lt.s32.totalorder %s17, 1
      %s566 = scalar_select %p565, %s17, 1
      %s567 = smul.addr %s566, 2
      %s568 = smul.addr %s567, 8
      %s569 = scalar_lea.vmem %s4, %s568
      %p570 = scmp.lt.s32.totalorder %s17, 1
      %s571 = scalar_select %p570, %s17, 1
      %s572 = smul.addr %s571, 2
      %s573 = scalar_lea.vmem %s5, %s572
      // Predicated region
      $region37: #{basic_res_block.4} parent=35 // pred_check
        %p574 = pneg %p124
      $region38: #{basic_res_block.4} parent=35 // pred_check_branch
        %576 = sbr.rel (%p574) target = $region40
      $region39: #{basic_res_block.4} parent=35 // pred_region
        _
      $region40: #{basic_res_block.4} parent=35 // pred_fallthru
        _
      // Predicated region
      $region41: #{basic_res_block.4} parent=35 // pred_check
        %p577 = pneg %p150
      $region42: #{basic_res_block.4} parent=35 // pred_check_branch
        %579 = sbr.rel (%p577) target = $region44
      $region43: #{basic_res_block.4} parent=35 // pred_region
        _
      $region44: #{basic_res_block.4} parent=35 // pred_fallthru
        _
    $region36: #{basic_res_block.4} parent=5 // pred_fallthru
      _
    %p580 = scmp.le.s32.totalorder 2, %s12
    // Predicated region
    $region45: #{basic_res_block.4} parent=5 // pred_check
      %p581 = pneg %p580
    $region46: #{basic_res_block.4} parent=5 // pred_check_branch
      %583 = sbr.rel (%p581) target = $region48
    $region47: #{basic_res_block.4} parent=5 // pred_region
      %s584 = ssub.s32 %s12, 2
      // Predicated region
      $region49: #{basic_res_block.4} parent=47 // pred_check
        %p585 = pneg %p130
      $region50: #{basic_res_block.4} parent=47 // pred_check_branch
        %587 = sbr.rel (%p585) target = $region52
      $region51: #{basic_res_block.4} parent=47 // pred_region
        %p588 = scmp.lt.s32.totalorder %s18, 1
        %s589 = scalar_select %p588, %s18, 1
        %s590 = smul.addr %s589, 2
        %s591 = smul.addr %s590, 8
        %s592 = scalar_lea.vmem %s4, %s591
      $region52: #{basic_res_block.4} parent=47 // pred_fallthru
        _
      // Predicated region
      $region53: #{basic_res_block.4} parent=47 // pred_check
        %p593 = pneg %p156
      $region54: #{basic_res_block.4} parent=47 // pred_check_branch
        %595 = sbr.rel (%p593) target = $region56
      $region55: #{basic_res_block.4} parent=47 // pred_region
        %p596 = scmp.lt.s32.totalorder %s18, 1
        %s597 = scalar_select %p596, %s18, 1
        %s598 = smul.addr %s597, 2
        %s599 = scalar_lea.vmem %s5, %s598
      $region56: #{basic_res_block.4} parent=47 // pred_fallthru
        _
    $region48: #{basic_res_block.4} parent=5 // pred_fallthru
      _
  $region6: #{basic_res_block.4} parent=0 // loop_footer
    %s16 = sadd.s32 1, %s12
  $region7: #{basic_res_block.4} parent=0 // loop_footer_branch
    %11 = sbr.rel target = $region3
  $region8: #{basic_res_block.4} parent=0 // loop_exit
    _

</llo_original>
